<compile_context>
chip_gen: v7x
topology: tpu7x:2x2x1
jax: 0.10.0
libtpu: 0.0.40
codegen_flags: <defaults>
</compile_context>

<pallas_src>
import math
import jax
import jax.numpy as jnp
from jax.experimental import pallas as pl
from jax.experimental.pallas import tpu as pltpu

# ---- synthetic model config (small shapes consistent with a BERT encoder) ----
VOCAB = 100
MAX_POS = 16
H = 32          # hidden size
NH = 2          # attention heads
HD = H // NH    # head dim
I = 64          # FFN intermediate size
NLAYERS = 2
NUM_LABELS = 4
LN_EPS = 1e-12

# rows of the packed per-layer vector table (NLAYERS, 8, 128)
_R_BQKV, _R_BO, _R_LN1G, _R_LN1B, _R_B1, _R_B2, _R_LN2G, _R_LN2B = range(8)
# rows of the packed head/embedding vector table (8, 128)
_R_EMB_G, _R_EMB_B, _R_CLS_B = 0, 1, 2


def _row(vec2d, r, width):
    # (8,128) table -> (1, width) slice, keeps everything 2-D / lane-friendly
    return vec2d[r:r + 1, :width]


def _layernorm(x, g, b, eps=LN_EPS):
    # one-pass statistics: var = E[x^2] - mu^2 (f32, eps kept for stability)
    mu = jnp.mean(x, axis=-1, keepdims=True)
    msq = jnp.mean(x * x, axis=-1, keepdims=True)
    var = msq - mu * mu
    return (x - mu) * jax.lax.rsqrt(var + eps) * g + b


# ----------------------------- fused Pallas kernel ----------------------------
def fused_encoder_kernel(x_ref, mask_ref, wqkv_ref, wo_ref, w1_ref, w2_ref,
                         lvec_ref, clsw_ref, hvec_ref, o_ref):
    # One grid step == one sequence.
    x = x_ref[0]                      # (S, H)  f32 token+position embeddings
    hvec = hvec_ref[...]              # (8, 128) packed head/embedding vectors
    S = x.shape[0]

    # additive padding mask for this sequence's keys: 0 for valid, -1e9 for pad
    kv = mask_ref[0, :, :S]           # (1, S) f32, 1 = valid key
    bias = (kv - 1.0) * 1e9           # (1, S), broadcasts over query rows

    # embedding LayerNorm
    x = _layernorm(x, _row(hvec, _R_EMB_G, H), _row(hvec, _R_EMB_B, H))

    for li in range(NLAYERS):                       # static unroll, weights resident
        lvec = lvec_ref[li]                         # (8, 128) packed layer vectors

        # fused QKV projection: one (S,H) x (H,3H) MXU push
        # (1/sqrt(HD) already folded into the Q columns of wqkv at init)
        qkv = jnp.dot(x.astype(jnp.bfloat16), wqkv_ref[li],
                      preferred_element_type=jnp.float32) + _row(lvec, _R_BQKV, 3 * H)

        # per-head attention on 2-D lane slices -- no 3-D reshapes/transposes.
        # Head merge is fused into the output projection: sum_h ctx_h @ Wo_h.
        attn = jnp.zeros((S, H), jnp.float32)
        for h in range(NH):
            q = qkv[:, h * HD:(h + 1) * HD].astype(jnp.bfloat16)
            k = qkv[:, H + h * HD:H + (h + 1) * HD].astype(jnp.bfloat16)
            v = qkv[:, 2 * H + h * HD:2 * H + (h + 1) * HD].astype(jnp.bfloat16)

            # scores: contract head dim of q and k directly (q @ k^T, no .T relayout)
            s = jax.lax.dot_general(q, k, (((1,), (1,)), ((), ())),
                                    preferred_element_type=jnp.float32) + bias

            # explicit softmax; divide on EUP via approximate reciprocal
            m = jnp.max(s, axis=-1, keepdims=True)
            e = jnp.exp(s - m)
            p = e * pl.reciprocal(jnp.sum(e, axis=-1, keepdims=True), approx=True)

            ctx = jnp.dot(p.astype(jnp.bfloat16), v,
                          preferred_element_type=jnp.float32)          # (S, HD)
            attn = attn + jnp.dot(ctx.astype(jnp.bfloat16),
                                  wo_ref[li, h * HD:(h + 1) * HD, :],
                                  preferred_element_type=jnp.float32)  # (S, H)

        attn = attn + _row(lvec, _R_BO, H)
        x1 = _layernorm(x + attn, _row(lvec, _R_LN1G, H), _row(lvec, _R_LN1B, H))

        # FFN
        hid = jnp.dot(x1.astype(jnp.bfloat16), w1_ref[li],
                      preferred_element_type=jnp.float32) + _row(lvec, _R_B1, I)
        # TODO(synk): HF BERT uses exact erf GELU; tanh approximation kept here
        # (agrees within ~1e-3) to stay on a known-good Mosaic lowering path.
        hid = jax.nn.gelu(hid)
        ff = jnp.dot(hid.astype(jnp.bfloat16), w2_ref[li],
                     preferred_element_type=jnp.float32) + _row(lvec, _R_B2, H)
        x = _layernorm(x1 + ff, _row(lvec, _R_LN2G, H), _row(lvec, _R_LN2B, H))

    # classifier head -> lane-dense (S, 128) padded logits slab (unmasked stores);
    # wrapper slices [:, :NUM_LABELS].
    logits = (jnp.dot(x.astype(jnp.bfloat16), clsw_ref[...],
                      preferred_element_type=jnp.float32)
              + _row(hvec, _R_CLS_B, 128))
    o_ref[0] = logits


# ------------------------------ parameter init --------------------------------
def init_params(key):
    def nrm(k, shape, std=0.02):
        return jax.random.normal(k, shape, dtype=jnp.float32) * std

    keys = jax.random.split(key, 3 + NLAYERS)

    head_vecs = jnp.zeros((8, 128), jnp.float32)
    head_vecs = head_vecs.at[_R_EMB_G, :H].set(1.0)   # emb LN gamma=1, beta=0, cls_b=0

    # classifier weight padded to 128 lanes for a lane-dense output store
    cls_w = jnp.zeros((H, 128), jnp.float32)
    cls_w = cls_w.at[:, :NUM_LABELS].set(nrm(keys[2], (H, NUM_LABELS)))

    qk_scale = 1.0 / math.sqrt(HD)
    wqkv, wo, w1, w2, lvecs = [], [], [], [], []
    for li in range(NLAYERS):
        lk = jax.random.split(keys[3 + li], 4)
        wq = nrm(lk[0], (H, 3 * H))
        # fold the attention scale 1/sqrt(HD) into the Q projection
        # (the Q bias -- zero in this synthetic init -- would be scaled identically)
        wq = wq.at[:, :H].multiply(qk_scale)
        wqkv.append(wq)
        wo.append(nrm(lk[1], (H, H)))
        w1.append(nrm(lk[2], (H, I)))
        w2.append(nrm(lk[3], (I, H)))
        lv = jnp.zeros((8, 128), jnp.float32)
        lv = lv.at[_R_LN1G, :H].set(1.0).at[_R_LN2G, :H].set(1.0)   # LN gammas
        lvecs.append(lv)

    return {
        "tok_emb": nrm(keys[0], (VOCAB, H)),
        "pos_emb": nrm(keys[1], (MAX_POS, H)),
        "cls_w": cls_w.astype(jnp.bfloat16),                     # (H, 128)
        "head_vecs": head_vecs,                                  # (8, 128) f32
        "wqkv": jnp.stack(wqkv).astype(jnp.bfloat16),            # (L, H, 3H)
        "wo": jnp.stack(wo).astype(jnp.bfloat16),                # (L, H, H)
        "w1": jnp.stack(w1).astype(jnp.bfloat16),                # (L, H, I)
        "w2": jnp.stack(w2).astype(jnp.bfloat16),                # (L, I, H)
        "layer_vecs": jnp.stack(lvecs),                          # (L, 8, 128) f32
    }


# ------------------------------ forward (EncoderModule.forward) ---------------
def forward(params, input_ids, attention_mask):
    B, S = input_ids.shape

    # embedding gather is glue (plain JAX); everything else runs in the kernel.
    x = params["tok_emb"][input_ids] + params["pos_emb"][None, :S, :]
    x = x.astype(jnp.float32)                                    # (B, S, H)

    # per-sequence key-valid vector padded to 128 lanes (O(B*S) input, not O((B*S)^2))
    mask = jnp.zeros((B, 1, 128), jnp.float32)
    mask = mask.at[:, 0, :S].set(attention_mask.astype(jnp.float32))

    logits_padded = pl.pallas_call(
        fused_encoder_kernel,
        out_shape=jax.ShapeDtypeStruct((B, S, 128), jnp.float32),
        grid=(B,),                                   # one sequence per grid step
        in_specs=[
            pl.BlockSpec((1, S, H), lambda b: (b, 0, 0)),            # x
            pl.BlockSpec((1, 1, 128), lambda b: (b, 0, 0)),          # key-valid mask
            pl.BlockSpec((NLAYERS, H, 3 * H), lambda b: (0, 0, 0)),  # wqkv (resident)
            pl.BlockSpec((NLAYERS, H, H), lambda b: (0, 0, 0)),      # wo
            pl.BlockSpec((NLAYERS, H, I), lambda b: (0, 0, 0)),      # w1
            pl.BlockSpec((NLAYERS, I, H), lambda b: (0, 0, 0)),      # w2
            pl.BlockSpec((NLAYERS, 8, 128), lambda b: (0, 0, 0)),    # packed layer vecs
            pl.BlockSpec((H, 128), lambda b: (0, 0)),                # classifier W
            pl.BlockSpec((8, 128), lambda b: (0, 0)),                # packed head vecs
        ],
        out_specs=pl.BlockSpec((1, S, 128), lambda b: (b, 0, 0)),
        compiler_params=pltpu.CompilerParams(
            dimension_semantics=("parallel",),       # shard sequences across TCs (v7x)
            vmem_limit_bytes=32 * 1024 * 1024,       # ample headroom; footprint < 1 MiB
        ),
    )(x, mask,
      params["wqkv"], params["wo"], params["w1"], params["w2"],
      params["layer_vecs"], params["cls_w"], params["head_vecs"])

    # NOTE: self.softmax = nn.Softmax(dim=1) is defined in __init__ but never
    # used in forward(), so it is intentionally not applied here.
    # TODO(synk): annotator/annotation embedding branches depend on pretrained
    # model internals (from_pretrained kwargs) and are not reproducible here.
    return logits_padded[:, :, :NUM_LABELS]


if __name__ == "__main__":
    B, S = 2, 8
    key = jax.random.PRNGKey(0)
    pkey, ikey = jax.random.split(key)
    params = init_params(pkey)

    input_ids = jax.random.randint(ikey, (B, S), 0, VOCAB, dtype=jnp.int32)
    attention_mask = jnp.ones((B, S), jnp.int32).at[1, S - 2:].set(0)  # some padding

    logits = jax.jit(forward)(params, input_ids, attention_mask)
    logits = jax.block_until_ready(logits)
    assert logits.shape == (B, S, NUM_LABELS)
    assert bool(jnp.all(jnp.isfinite(logits)))
    print("KERNEL_OK")
</pallas_src>

<mosaic_0001>
module attributes {stable_mosaic.version = 11 : i64} {
  func.func @fused_encoder_kernel(%arg0: i32, %arg1: memref<1x8x32xf32, #tpu.memory_space<vmem>>, %arg2: memref<1x1x128xf32, #tpu.memory_space<vmem>>, %arg3: memref<2x32x96xbf16, #tpu.memory_space<vmem>>, %arg4: memref<2x32x32xbf16, #tpu.memory_space<vmem>>, %arg5: memref<2x32x64xbf16, #tpu.memory_space<vmem>>, %arg6: memref<2x64x32xbf16, #tpu.memory_space<vmem>>, %arg7: memref<2x8x128xf32, #tpu.memory_space<vmem>>, %arg8: memref<32x128xbf16, #tpu.memory_space<vmem>>, %arg9: memref<8x128xf32, #tpu.memory_space<vmem>>, %arg10: memref<1x8x128xf32, #tpu.memory_space<vmem>>) attributes {dimension_semantics = [#tpu.dimension_semantics<parallel>], iteration_bounds = array<i64: 2>, scalar_prefetch = 0 : i64, scratch_operands = 0 : i64, tpu.core_type = #tpu.core_type<tc>, window_params = [{transform_indices = @transform_0, window_bounds = array<i64: 1, 8, 32>}, {transform_indices = @transform_1, window_bounds = array<i64: 1, 1, 128>}, {pipeline_mode = #tpu.pipeline_mode<synchronous>, transform_indices = @transform_2, window_bounds = array<i64: 2, 32, 96>}, {pipeline_mode = #tpu.pipeline_mode<synchronous>, transform_indices = @transform_3, window_bounds = array<i64: 2, 32, 32>}, {pipeline_mode = #tpu.pipeline_mode<synchronous>, transform_indices = @transform_4, window_bounds = array<i64: 2, 32, 64>}, {pipeline_mode = #tpu.pipeline_mode<synchronous>, transform_indices = @transform_5, window_bounds = array<i64: 2, 64, 32>}, {pipeline_mode = #tpu.pipeline_mode<synchronous>, transform_indices = @transform_6, window_bounds = array<i64: 2, 8, 128>}, {pipeline_mode = #tpu.pipeline_mode<synchronous>, transform_indices = @transform_7, window_bounds = array<i64: 32, 128>}, {pipeline_mode = #tpu.pipeline_mode<synchronous>, transform_indices = @transform_8, window_bounds = array<i64: 8, 128>}, {transform_indices = @transform_9, window_bounds = array<i64: 1, 8, 128>}]} {
    %c0 = arith.constant 0 : index
    %c0_0 = arith.constant 0 : index
    %c0_1 = arith.constant 0 : index
    %0 = vector.load %arg1[%c0, %c0_0, %c0_1] : memref<1x8x32xf32, #tpu.memory_space<vmem>>, vector<1x8x32xf32>
    %1 = vector.shape_cast %0 : vector<1x8x32xf32> to vector<8x32xf32>
    %c0_2 = arith.constant 0 : index
    %c0_3 = arith.constant 0 : index
    %2 = vector.load %arg9[%c0_2, %c0_3] : memref<8x128xf32, #tpu.memory_space<vmem>>, vector<8x128xf32>
    %c0_4 = arith.constant 0 : index
    %c0_5 = arith.constant 0 : index
    %c0_6 = arith.constant 0 : index
    %3 = vector.load %arg2[%c0_4, %c0_5, %c0_6] : memref<1x1x128xf32, #tpu.memory_space<vmem>>, vector<1x1x8xf32>
    %4 = vector.shape_cast %3 : vector<1x1x8xf32> to vector<1x8xf32>
    %cst = arith.constant 1.000000e+00 : f32
    %5 = vector.broadcast %cst : f32 to vector<1x8xf32>
    %6 = arith.subf %4, %5 : vector<1x8xf32>
    %cst_7 = arith.constant 1.000000e+09 : f32
    %7 = vector.broadcast %cst_7 : f32 to vector<1x8xf32>
    %8 = arith.mulf %6, %7 : vector<1x8xf32>
    %9 = vector.extract_strided_slice %2 {offsets = [0, 0], sizes = [1, 32], strides = [1, 1]} : vector<8x128xf32> to vector<1x32xf32>
    %10 = vector.extract_strided_slice %2 {offsets = [1, 0], sizes = [1, 32], strides = [1, 1]} : vector<8x128xf32> to vector<1x32xf32>
    %cst_8 = arith.constant dense<0.000000e+00> : vector<8xf32>
    %11 = vector.multi_reduction <add>, %1, %cst_8 [1] : vector<8x32xf32> to vector<8xf32>
    %12 = vector.shape_cast %11 : vector<8xf32> to vector<8x1xf32>
    %cst_9 = arith.constant 3.200000e+01 : f32
    %13 = vector.broadcast %cst_9 : f32 to vector<8x1xf32>
    %14 = arith.divf %12, %13 : vector<8x1xf32>
    %15 = arith.mulf %1, %1 : vector<8x32xf32>
    %cst_10 = arith.constant dense<0.000000e+00> : vector<8xf32>
    %16 = vector.multi_reduction <add>, %15, %cst_10 [1] : vector<8x32xf32> to vector<8xf32>
    %17 = vector.shape_cast %16 : vector<8xf32> to vector<8x1xf32>
    %cst_11 = arith.constant 3.200000e+01 : f32
    %18 = vector.broadcast %cst_11 : f32 to vector<8x1xf32>
    %19 = arith.divf %17, %18 : vector<8x1xf32>
    %20 = arith.mulf %14, %14 : vector<8x1xf32>
    %21 = arith.subf %19, %20 : vector<8x1xf32>
    %22 = vector.broadcast %14 : vector<8x1xf32> to vector<8x32xf32>
    %23 = arith.subf %1, %22 : vector<8x32xf32>
    %cst_12 = arith.constant 9.99999996E-13 : f32
    %24 = vector.broadcast %cst_12 : f32 to vector<8x1xf32>
    %25 = arith.addf %21, %24 : vector<8x1xf32>
    %26 = math.rsqrt %25 : vector<8x1xf32>
    %27 = vector.broadcast %26 : vector<8x1xf32> to vector<8x32xf32>
    %28 = arith.mulf %23, %27 : vector<8x32xf32>
    %29 = vector.broadcast %9 : vector<1x32xf32> to vector<8x32xf32>
    %30 = arith.mulf %28, %29 : vector<8x32xf32>
    %31 = vector.broadcast %10 : vector<1x32xf32> to vector<8x32xf32>
    %32 = arith.addf %30, %31 : vector<8x32xf32>
    %c0_13 = arith.constant 0 : index
    %c0_14 = arith.constant 0 : index
    %c0_15 = arith.constant 0 : index
    %33 = vector.load %arg7[%c0_13, %c0_14, %c0_15] : memref<2x8x128xf32, #tpu.memory_space<vmem>>, vector<1x8x128xf32>
    %34 = vector.shape_cast %33 : vector<1x8x128xf32> to vector<8x128xf32>
    %35 = arith.truncf %32 : vector<8x32xf32> to vector<8x32xbf16>
    %c0_16 = arith.constant 0 : index
    %c0_17 = arith.constant 0 : index
    %c0_18 = arith.constant 0 : index
    %36 = vector.load %arg3[%c0_16, %c0_17, %c0_18] : memref<2x32x96xbf16, #tpu.memory_space<vmem>>, vector<1x32x96xbf16>
    %37 = vector.shape_cast %36 : vector<1x32x96xbf16> to vector<32x96xbf16>
    %cst_19 = arith.constant dense<0.000000e+00> : vector<8x96xf32>
    %38 = tpu.matmul %35, %37, %cst_19 {dimension_numbers = #tpu.dot_dimension_numbers<[1], [0], [0], [1], [0, 0, 1, 1], [], []>} : vector<8x32xbf16>, vector<32x96xbf16>, vector<8x96xf32> -> vector<8x96xf32>
    %39 = vector.extract_strided_slice %34 {offsets = [0, 0], sizes = [1, 96], strides = [1, 1]} : vector<8x128xf32> to vector<1x96xf32>
    %40 = vector.broadcast %39 : vector<1x96xf32> to vector<8x96xf32>
    %41 = arith.addf %38, %40 : vector<8x96xf32>
    %cst_20 = arith.constant 0.000000e+00 : f32
    %42 = vector.broadcast %cst_20 : f32 to vector<8x32xf32>
    %43 = vector.extract_strided_slice %41 {offsets = [0, 0], sizes = [8, 16], strides = [1, 1]} : vector<8x96xf32> to vector<8x16xf32>
    %44 = arith.truncf %43 : vector<8x16xf32> to vector<8x16xbf16>
    %45 = vector.extract_strided_slice %41 {offsets = [0, 32], sizes = [8, 16], strides = [1, 1]} : vector<8x96xf32> to vector<8x16xf32>
    %46 = arith.truncf %45 : vector<8x16xf32> to vector<8x16xbf16>
    %47 = vector.extract_strided_slice %41 {offsets = [0, 64], sizes = [8, 16], strides = [1, 1]} : vector<8x96xf32> to vector<8x16xf32>
    %48 = arith.truncf %47 : vector<8x16xf32> to vector<8x16xbf16>
    %cst_21 = arith.constant dense<0.000000e+00> : vector<8x8xf32>
    %49 = tpu.matmul %44, %46, %cst_21 {dimension_numbers = #tpu.dot_dimension_numbers<[1], [1], [0], [0], [0, 0, 1, 0], [], []>} : vector<8x16xbf16>, vector<8x16xbf16>, vector<8x8xf32> -> vector<8x8xf32>
    %50 = vector.broadcast %8 : vector<1x8xf32> to vector<8x8xf32>
    %51 = arith.addf %49, %50 : vector<8x8xf32>
    %cst_22 = arith.constant dense<0xFF800000> : vector<8xf32>
    %52 = vector.multi_reduction <maximumf>, %51, %cst_22 [1] : vector<8x8xf32> to vector<8xf32>
    %53 = vector.shape_cast %52 : vector<8xf32> to vector<8x1xf32>
    %54 = vector.broadcast %53 : vector<8x1xf32> to vector<8x8xf32>
    %55 = arith.subf %51, %54 : vector<8x8xf32>
    %56 = math.exp %55 : vector<8x8xf32>
    %cst_23 = arith.constant dense<0.000000e+00> : vector<8xf32>
    %57 = vector.multi_reduction <add>, %56, %cst_23 [1] : vector<8x8xf32> to vector<8xf32>
    %58 = vector.shape_cast %57 : vector<8xf32> to vector<8x1xf32>
    %59 = tpu.reciprocal %58 {approx = true} : vector<8x1xf32> -> vector<8x1xf32>
    %60 = vector.broadcast %59 : vector<8x1xf32> to vector<8x8xf32>
    %61 = arith.mulf %56, %60 : vector<8x8xf32>
    %62 = arith.truncf %61 : vector<8x8xf32> to vector<8x8xbf16>
    %cst_24 = arith.constant dense<0.000000e+00> : vector<8x16xf32>
    %63 = tpu.matmul %62, %48, %cst_24 {dimension_numbers = #tpu.dot_dimension_numbers<[1], [0], [0], [1], [0, 0, 1, 1], [], []>} : vector<8x8xbf16>, vector<8x16xbf16>, vector<8x16xf32> -> vector<8x16xf32>
    %64 = arith.truncf %63 : vector<8x16xf32> to vector<8x16xbf16>
    %c0_25 = arith.constant 0 : index
    %c0_26 = arith.constant 0 : index
    %c0_27 = arith.constant 0 : index
    %65 = vector.load %arg4[%c0_25, %c0_26, %c0_27] : memref<2x32x32xbf16, #tpu.memory_space<vmem>>, vector<1x16x32xbf16>
    %66 = vector.shape_cast %65 : vector<1x16x32xbf16> to vector<16x32xbf16>
    %cst_28 = arith.constant dense<0.000000e+00> : vector<8x32xf32>
    %67 = tpu.matmul %64, %66, %cst_28 {dimension_numbers = #tpu.dot_dimension_numbers<[1], [0], [0], [1], [0, 0, 1, 1], [], []>} : vector<8x16xbf16>, vector<16x32xbf16>, vector<8x32xf32> -> vector<8x32xf32>
    %68 = arith.addf %42, %67 : vector<8x32xf32>
    %69 = vector.extract_strided_slice %41 {offsets = [0, 16], sizes = [8, 16], strides = [1, 1]} : vector<8x96xf32> to vector<8x16xf32>
    %70 = arith.truncf %69 : vector<8x16xf32> to vector<8x16xbf16>
    %71 = vector.extract_strided_slice %41 {offsets = [0, 48], sizes = [8, 16], strides = [1, 1]} : vector<8x96xf32> to vector<8x16xf32>
    %72 = arith.truncf %71 : vector<8x16xf32> to vector<8x16xbf16>
    %73 = vector.extract_strided_slice %41 {offsets = [0, 80], sizes = [8, 16], strides = [1, 1]} : vector<8x96xf32> to vector<8x16xf32>
    %74 = arith.truncf %73 : vector<8x16xf32> to vector<8x16xbf16>
    %cst_29 = arith.constant dense<0.000000e+00> : vector<8x8xf32>
    %75 = tpu.matmul %70, %72, %cst_29 {dimension_numbers = #tpu.dot_dimension_numbers<[1], [1], [0], [0], [0, 0, 1, 0], [], []>} : vector<8x16xbf16>, vector<8x16xbf16>, vector<8x8xf32> -> vector<8x8xf32>
    %76 = vector.broadcast %8 : vector<1x8xf32> to vector<8x8xf32>
    %77 = arith.addf %75, %76 : vector<8x8xf32>
    %cst_30 = arith.constant dense<0xFF800000> : vector<8xf32>
    %78 = vector.multi_reduction <maximumf>, %77, %cst_30 [1] : vector<8x8xf32> to vector<8xf32>
    %79 = vector.shape_cast %78 : vector<8xf32> to vector<8x1xf32>
    %80 = vector.broadcast %79 : vector<8x1xf32> to vector<8x8xf32>
    %81 = arith.subf %77, %80 : vector<8x8xf32>
    %82 = math.exp %81 : vector<8x8xf32>
    %cst_31 = arith.constant dense<0.000000e+00> : vector<8xf32>
    %83 = vector.multi_reduction <add>, %82, %cst_31 [1] : vector<8x8xf32> to vector<8xf32>
    %84 = vector.shape_cast %83 : vector<8xf32> to vector<8x1xf32>
    %85 = tpu.reciprocal %84 {approx = true} : vector<8x1xf32> -> vector<8x1xf32>
    %86 = vector.broadcast %85 : vector<8x1xf32> to vector<8x8xf32>
    %87 = arith.mulf %82, %86 : vector<8x8xf32>
    %88 = arith.truncf %87 : vector<8x8xf32> to vector<8x8xbf16>
    %cst_32 = arith.constant dense<0.000000e+00> : vector<8x16xf32>
    %89 = tpu.matmul %88, %74, %cst_32 {dimension_numbers = #tpu.dot_dimension_numbers<[1], [0], [0], [1], [0, 0, 1, 1], [], []>} : vector<8x8xbf16>, vector<8x16xbf16>, vector<8x16xf32> -> vector<8x16xf32>
    %90 = arith.truncf %89 : vector<8x16xf32> to vector<8x16xbf16>
    %c0_33 = arith.constant 0 : index
    %c16 = arith.constant 16 : index
    %c0_34 = arith.constant 0 : index
    %91 = vector.load %arg4[%c0_33, %c16, %c0_34] : memref<2x32x32xbf16, #tpu.memory_space<vmem>>, vector<1x16x32xbf16>
    %92 = vector.shape_cast %91 : vector<1x16x32xbf16> to vector<16x32xbf16>
    %cst_35 = arith.constant dense<0.000000e+00> : vector<8x32xf32>
    %93 = tpu.matmul %90, %92, %cst_35 {dimension_numbers = #tpu.dot_dimension_numbers<[1], [0], [0], [1], [0, 0, 1, 1], [], []>} : vector<8x16xbf16>, vector<16x32xbf16>, vector<8x32xf32> -> vector<8x32xf32>
    %94 = arith.addf %68, %93 : vector<8x32xf32>
    %95 = vector.extract_strided_slice %34 {offsets = [1, 0], sizes = [1, 32], strides = [1, 1]} : vector<8x128xf32> to vector<1x32xf32>
    %96 = vector.broadcast %95 : vector<1x32xf32> to vector<8x32xf32>
    %97 = arith.addf %94, %96 : vector<8x32xf32>
    %98 = arith.addf %32, %97 : vector<8x32xf32>
    %99 = vector.extract_strided_slice %34 {offsets = [2, 0], sizes = [1, 32], strides = [1, 1]} : vector<8x128xf32> to vector<1x32xf32>
    %100 = vector.extract_strided_slice %34 {offsets = [3, 0], sizes = [1, 32], strides = [1, 1]} : vector<8x128xf32> to vector<1x32xf32>
    %cst_36 = arith.constant dense<0.000000e+00> : vector<8xf32>
    %101 = vector.multi_reduction <add>, %98, %cst_36 [1] : vector<8x32xf32> to vector<8xf32>
    %102 = vector.shape_cast %101 : vector<8xf32> to vector<8x1xf32>
    %cst_37 = arith.constant 3.200000e+01 : f32
    %103 = vector.broadcast %cst_37 : f32 to vector<8x1xf32>
    %104 = arith.divf %102, %103 : vector<8x1xf32>
    %105 = arith.mulf %98, %98 : vector<8x32xf32>
    %cst_38 = arith.constant dense<0.000000e+00> : vector<8xf32>
    %106 = vector.multi_reduction <add>, %105, %cst_38 [1] : vector<8x32xf32> to vector<8xf32>
    %107 = vector.shape_cast %106 : vector<8xf32> to vector<8x1xf32>
    %cst_39 = arith.constant 3.200000e+01 : f32
    %108 = vector.broadcast %cst_39 : f32 to vector<8x1xf32>
    %109 = arith.divf %107, %108 : vector<8x1xf32>
    %110 = arith.mulf %104, %104 : vector<8x1xf32>
    %111 = arith.subf %109, %110 : vector<8x1xf32>
    %112 = vector.broadcast %104 : vector<8x1xf32> to vector<8x32xf32>
    %113 = arith.subf %98, %112 : vector<8x32xf32>
    %cst_40 = arith.constant 9.99999996E-13 : f32
    %114 = vector.broadcast %cst_40 : f32 to vector<8x1xf32>
    %115 = arith.addf %111, %114 : vector<8x1xf32>
    %116 = math.rsqrt %115 : vector<8x1xf32>
    %117 = vector.broadcast %116 : vector<8x1xf32> to vector<8x32xf32>
    %118 = arith.mulf %113, %117 : vector<8x32xf32>
    %119 = vector.broadcast %99 : vector<1x32xf32> to vector<8x32xf32>
    %120 = arith.mulf %118, %119 : vector<8x32xf32>
    %121 = vector.broadcast %100 : vector<1x32xf32> to vector<8x32xf32>
    %122 = arith.addf %120, %121 : vector<8x32xf32>
    %123 = arith.truncf %122 : vector<8x32xf32> to vector<8x32xbf16>
    %c0_41 = arith.constant 0 : index
    %c0_42 = arith.constant 0 : index
    %c0_43 = arith.constant 0 : index
    %124 = vector.load %arg5[%c0_41, %c0_42, %c0_43] : memref<2x32x64xbf16, #tpu.memory_space<vmem>>, vector<1x32x64xbf16>
    %125 = vector.shape_cast %124 : vector<1x32x64xbf16> to vector<32x64xbf16>
    %cst_44 = arith.constant dense<0.000000e+00> : vector<8x64xf32>
    %126 = tpu.matmul %123, %125, %cst_44 {dimension_numbers = #tpu.dot_dimension_numbers<[1], [0], [0], [1], [0, 0, 1, 1], [], []>} : vector<8x32xbf16>, vector<32x64xbf16>, vector<8x64xf32> -> vector<8x64xf32>
    %127 = vector.extract_strided_slice %34 {offsets = [4, 0], sizes = [1, 64], strides = [1, 1]} : vector<8x128xf32> to vector<1x64xf32>
    %128 = vector.broadcast %127 : vector<1x64xf32> to vector<8x64xf32>
    %129 = arith.addf %126, %128 : vector<8x64xf32>
    %130 = arith.mulf %129, %129 : vector<8x64xf32>
    %131 = arith.mulf %129, %130 : vector<8x64xf32>
    %cst_45 = arith.constant 4.471500e-02 : f32
    %132 = vector.broadcast %cst_45 : f32 to vector<8x64xf32>
    %133 = arith.mulf %132, %131 : vector<8x64xf32>
    %134 = arith.addf %129, %133 : vector<8x64xf32>
    %cst_46 = arith.constant 0.797884583 : f32
    %135 = vector.broadcast %cst_46 : f32 to vector<8x64xf32>
    %136 = arith.mulf %135, %134 : vector<8x64xf32>
    %137 = math.tanh %136 : vector<8x64xf32>
    %cst_47 = arith.constant 1.000000e+00 : f32
    %138 = vector.broadcast %cst_47 : f32 to vector<8x64xf32>
    %139 = arith.addf %138, %137 : vector<8x64xf32>
    %cst_48 = arith.constant 5.000000e-01 : f32
    %140 = vector.broadcast %cst_48 : f32 to vector<8x64xf32>
    %141 = arith.mulf %140, %139 : vector<8x64xf32>
    %142 = arith.mulf %129, %141 : vector<8x64xf32>
    %143 = arith.truncf %142 : vector<8x64xf32> to vector<8x64xbf16>
    %c0_49 = arith.constant 0 : index
    %c0_50 = arith.constant 0 : index
    %c0_51 = arith.constant 0 : index
    %144 = vector.load %arg6[%c0_49, %c0_50, %c0_51] : memref<2x64x32xbf16, #tpu.memory_space<vmem>>, vector<1x64x32xbf16>
    %145 = vector.shape_cast %144 : vector<1x64x32xbf16> to vector<64x32xbf16>
    %cst_52 = arith.constant dense<0.000000e+00> : vector<8x32xf32>
    %146 = tpu.matmul %143, %145, %cst_52 {dimension_numbers = #tpu.dot_dimension_numbers<[1], [0], [0], [1], [0, 0, 1, 1], [], []>} : vector<8x64xbf16>, vector<64x32xbf16>, vector<8x32xf32> -> vector<8x32xf32>
    %147 = vector.extract_strided_slice %34 {offsets = [5, 0], sizes = [1, 32], strides = [1, 1]} : vector<8x128xf32> to vector<1x32xf32>
    %148 = vector.broadcast %147 : vector<1x32xf32> to vector<8x32xf32>
    %149 = arith.addf %146, %148 : vector<8x32xf32>
    %150 = arith.addf %122, %149 : vector<8x32xf32>
    %151 = vector.extract_strided_slice %34 {offsets = [6, 0], sizes = [1, 32], strides = [1, 1]} : vector<8x128xf32> to vector<1x32xf32>
    %152 = vector.extract_strided_slice %34 {offsets = [7, 0], sizes = [1, 32], strides = [1, 1]} : vector<8x128xf32> to vector<1x32xf32>
    %cst_53 = arith.constant dense<0.000000e+00> : vector<8xf32>
    %153 = vector.multi_reduction <add>, %150, %cst_53 [1] : vector<8x32xf32> to vector<8xf32>
    %154 = vector.shape_cast %153 : vector<8xf32> to vector<8x1xf32>
    %cst_54 = arith.constant 3.200000e+01 : f32
    %155 = vector.broadcast %cst_54 : f32 to vector<8x1xf32>
    %156 = arith.divf %154, %155 : vector<8x1xf32>
    %157 = arith.mulf %150, %150 : vector<8x32xf32>
    %cst_55 = arith.constant dense<0.000000e+00> : vector<8xf32>
    %158 = vector.multi_reduction <add>, %157, %cst_55 [1] : vector<8x32xf32> to vector<8xf32>
    %159 = vector.shape_cast %158 : vector<8xf32> to vector<8x1xf32>
    %cst_56 = arith.constant 3.200000e+01 : f32
    %160 = vector.broadcast %cst_56 : f32 to vector<8x1xf32>
    %161 = arith.divf %159, %160 : vector<8x1xf32>
    %162 = arith.mulf %156, %156 : vector<8x1xf32>
    %163 = arith.subf %161, %162 : vector<8x1xf32>
    %164 = vector.broadcast %156 : vector<8x1xf32> to vector<8x32xf32>
    %165 = arith.subf %150, %164 : vector<8x32xf32>
    %cst_57 = arith.constant 9.99999996E-13 : f32
    %166 = vector.broadcast %cst_57 : f32 to vector<8x1xf32>
    %167 = arith.addf %163, %166 : vector<8x1xf32>
    %168 = math.rsqrt %167 : vector<8x1xf32>
    %169 = vector.broadcast %168 : vector<8x1xf32> to vector<8x32xf32>
    %170 = arith.mulf %165, %169 : vector<8x32xf32>
    %171 = vector.broadcast %151 : vector<1x32xf32> to vector<8x32xf32>
    %172 = arith.mulf %170, %171 : vector<8x32xf32>
    %173 = vector.broadcast %152 : vector<1x32xf32> to vector<8x32xf32>
    %174 = arith.addf %172, %173 : vector<8x32xf32>
    %c1 = arith.constant 1 : index
    %c0_58 = arith.constant 0 : index
    %c0_59 = arith.constant 0 : index
    %175 = vector.load %arg7[%c1, %c0_58, %c0_59] : memref<2x8x128xf32, #tpu.memory_space<vmem>>, vector<1x8x128xf32>
    %176 = vector.shape_cast %175 : vector<1x8x128xf32> to vector<8x128xf32>
    %177 = arith.truncf %174 : vector<8x32xf32> to vector<8x32xbf16>
    %c1_60 = arith.constant 1 : index
    %c0_61 = arith.constant 0 : index
    %c0_62 = arith.constant 0 : index
    %178 = vector.load %arg3[%c1_60, %c0_61, %c0_62] : memref<2x32x96xbf16, #tpu.memory_space<vmem>>, vector<1x32x96xbf16>
    %179 = vector.shape_cast %178 : vector<1x32x96xbf16> to vector<32x96xbf16>
    %cst_63 = arith.constant dense<0.000000e+00> : vector<8x96xf32>
    %180 = tpu.matmul %177, %179, %cst_63 {dimension_numbers = #tpu.dot_dimension_numbers<[1], [0], [0], [1], [0, 0, 1, 1], [], []>} : vector<8x32xbf16>, vector<32x96xbf16>, vector<8x96xf32> -> vector<8x96xf32>
    %181 = vector.extract_strided_slice %176 {offsets = [0, 0], sizes = [1, 96], strides = [1, 1]} : vector<8x128xf32> to vector<1x96xf32>
    %182 = vector.broadcast %181 : vector<1x96xf32> to vector<8x96xf32>
    %183 = arith.addf %180, %182 : vector<8x96xf32>
    %cst_64 = arith.constant 0.000000e+00 : f32
    %184 = vector.broadcast %cst_64 : f32 to vector<8x32xf32>
    %185 = vector.extract_strided_slice %183 {offsets = [0, 0], sizes = [8, 16], strides = [1, 1]} : vector<8x96xf32> to vector<8x16xf32>
    %186 = arith.truncf %185 : vector<8x16xf32> to vector<8x16xbf16>
    %187 = vector.extract_strided_slice %183 {offsets = [0, 32], sizes = [8, 16], strides = [1, 1]} : vector<8x96xf32> to vector<8x16xf32>
    %188 = arith.truncf %187 : vector<8x16xf32> to vector<8x16xbf16>
    %189 = vector.extract_strided_slice %183 {offsets = [0, 64], sizes = [8, 16], strides = [1, 1]} : vector<8x96xf32> to vector<8x16xf32>
    %190 = arith.truncf %189 : vector<8x16xf32> to vector<8x16xbf16>
    %cst_65 = arith.constant dense<0.000000e+00> : vector<8x8xf32>
    %191 = tpu.matmul %186, %188, %cst_65 {dimension_numbers = #tpu.dot_dimension_numbers<[1], [1], [0], [0], [0, 0, 1, 0], [], []>} : vector<8x16xbf16>, vector<8x16xbf16>, vector<8x8xf32> -> vector<8x8xf32>
    %192 = vector.broadcast %8 : vector<1x8xf32> to vector<8x8xf32>
    %193 = arith.addf %191, %192 : vector<8x8xf32>
    %cst_66 = arith.constant dense<0xFF800000> : vector<8xf32>
    %194 = vector.multi_reduction <maximumf>, %193, %cst_66 [1] : vector<8x8xf32> to vector<8xf32>
    %195 = vector.shape_cast %194 : vector<8xf32> to vector<8x1xf32>
    %196 = vector.broadcast %195 : vector<8x1xf32> to vector<8x8xf32>
    %197 = arith.subf %193, %196 : vector<8x8xf32>
    %198 = math.exp %197 : vector<8x8xf32>
    %cst_67 = arith.constant dense<0.000000e+00> : vector<8xf32>
    %199 = vector.multi_reduction <add>, %198, %cst_67 [1] : vector<8x8xf32> to vector<8xf32>
    %200 = vector.shape_cast %199 : vector<8xf32> to vector<8x1xf32>
    %201 = tpu.reciprocal %200 {approx = true} : vector<8x1xf32> -> vector<8x1xf32>
    %202 = vector.broadcast %201 : vector<8x1xf32> to vector<8x8xf32>
    %203 = arith.mulf %198, %202 : vector<8x8xf32>
    %204 = arith.truncf %203 : vector<8x8xf32> to vector<8x8xbf16>
    %cst_68 = arith.constant dense<0.000000e+00> : vector<8x16xf32>
    %205 = tpu.matmul %204, %190, %cst_68 {dimension_numbers = #tpu.dot_dimension_numbers<[1], [0], [0], [1], [0, 0, 1, 1], [], []>} : vector<8x8xbf16>, vector<8x16xbf16>, vector<8x16xf32> -> vector<8x16xf32>
    %206 = arith.truncf %205 : vector<8x16xf32> to vector<8x16xbf16>
    %c1_69 = arith.constant 1 : index
    %c0_70 = arith.constant 0 : index
    %c0_71 = arith.constant 0 : index
    %207 = vector.load %arg4[%c1_69, %c0_70, %c0_71] : memref<2x32x32xbf16, #tpu.memory_space<vmem>>, vector<1x16x32xbf16>
    %208 = vector.shape_cast %207 : vector<1x16x32xbf16> to vector<16x32xbf16>
    %cst_72 = arith.constant dense<0.000000e+00> : vector<8x32xf32>
    %209 = tpu.matmul %206, %208, %cst_72 {dimension_numbers = #tpu.dot_dimension_numbers<[1], [0], [0], [1], [0, 0, 1, 1], [], []>} : vector<8x16xbf16>, vector<16x32xbf16>, vector<8x32xf32> -> vector<8x32xf32>
    %210 = arith.addf %184, %209 : vector<8x32xf32>
    %211 = vector.extract_strided_slice %183 {offsets = [0, 16], sizes = [8, 16], strides = [1, 1]} : vector<8x96xf32> to vector<8x16xf32>
    %212 = arith.truncf %211 : vector<8x16xf32> to vector<8x16xbf16>
    %213 = vector.extract_strided_slice %183 {offsets = [0, 48], sizes = [8, 16], strides = [1, 1]} : vector<8x96xf32> to vector<8x16xf32>
    %214 = arith.truncf %213 : vector<8x16xf32> to vector<8x16xbf16>
    %215 = vector.extract_strided_slice %183 {offsets = [0, 80], sizes = [8, 16], strides = [1, 1]} : vector<8x96xf32> to vector<8x16xf32>
    %216 = arith.truncf %215 : vector<8x16xf32> to vector<8x16xbf16>
    %cst_73 = arith.constant dense<0.000000e+00> : vector<8x8xf32>
    %217 = tpu.matmul %212, %214, %cst_73 {dimension_numbers = #tpu.dot_dimension_numbers<[1], [1], [0], [0], [0, 0, 1, 0], [], []>} : vector<8x16xbf16>, vector<8x16xbf16>, vector<8x8xf32> -> vector<8x8xf32>
    %218 = vector.broadcast %8 : vector<1x8xf32> to vector<8x8xf32>
    %219 = arith.addf %217, %218 : vector<8x8xf32>
    %cst_74 = arith.constant dense<0xFF800000> : vector<8xf32>
    %220 = vector.multi_reduction <maximumf>, %219, %cst_74 [1] : vector<8x8xf32> to vector<8xf32>
    %221 = vector.shape_cast %220 : vector<8xf32> to vector<8x1xf32>
    %222 = vector.broadcast %221 : vector<8x1xf32> to vector<8x8xf32>
    %223 = arith.subf %219, %222 : vector<8x8xf32>
    %224 = math.exp %223 : vector<8x8xf32>
    %cst_75 = arith.constant dense<0.000000e+00> : vector<8xf32>
    %225 = vector.multi_reduction <add>, %224, %cst_75 [1] : vector<8x8xf32> to vector<8xf32>
    %226 = vector.shape_cast %225 : vector<8xf32> to vector<8x1xf32>
    %227 = tpu.reciprocal %226 {approx = true} : vector<8x1xf32> -> vector<8x1xf32>
    %228 = vector.broadcast %227 : vector<8x1xf32> to vector<8x8xf32>
    %229 = arith.mulf %224, %228 : vector<8x8xf32>
    %230 = arith.truncf %229 : vector<8x8xf32> to vector<8x8xbf16>
    %cst_76 = arith.constant dense<0.000000e+00> : vector<8x16xf32>
    %231 = tpu.matmul %230, %216, %cst_76 {dimension_numbers = #tpu.dot_dimension_numbers<[1], [0], [0], [1], [0, 0, 1, 1], [], []>} : vector<8x8xbf16>, vector<8x16xbf16>, vector<8x16xf32> -> vector<8x16xf32>
    %232 = arith.truncf %231 : vector<8x16xf32> to vector<8x16xbf16>
    %c1_77 = arith.constant 1 : index
    %c16_78 = arith.constant 16 : index
    %c0_79 = arith.constant 0 : index
    %233 = vector.load %arg4[%c1_77, %c16_78, %c0_79] : memref<2x32x32xbf16, #tpu.memory_space<vmem>>, vector<1x16x32xbf16>
    %234 = vector.shape_cast %233 : vector<1x16x32xbf16> to vector<16x32xbf16>
    %cst_80 = arith.constant dense<0.000000e+00> : vector<8x32xf32>
    %235 = tpu.matmul %232, %234, %cst_80 {dimension_numbers = #tpu.dot_dimension_numbers<[1], [0], [0], [1], [0, 0, 1, 1], [], []>} : vector<8x16xbf16>, vector<16x32xbf16>, vector<8x32xf32> -> vector<8x32xf32>
    %236 = arith.addf %210, %235 : vector<8x32xf32>
    %237 = vector.extract_strided_slice %176 {offsets = [1, 0], sizes = [1, 32], strides = [1, 1]} : vector<8x128xf32> to vector<1x32xf32>
    %238 = vector.broadcast %237 : vector<1x32xf32> to vector<8x32xf32>
    %239 = arith.addf %236, %238 : vector<8x32xf32>
    %240 = arith.addf %174, %239 : vector<8x32xf32>
    %241 = vector.extract_strided_slice %176 {offsets = [2, 0], sizes = [1, 32], strides = [1, 1]} : vector<8x128xf32> to vector<1x32xf32>
    %242 = vector.extract_strided_slice %176 {offsets = [3, 0], sizes = [1, 32], strides = [1, 1]} : vector<8x128xf32> to vector<1x32xf32>
    %cst_81 = arith.constant dense<0.000000e+00> : vector<8xf32>
    %243 = vector.multi_reduction <add>, %240, %cst_81 [1] : vector<8x32xf32> to vector<8xf32>
    %244 = vector.shape_cast %243 : vector<8xf32> to vector<8x1xf32>
    %cst_82 = arith.constant 3.200000e+01 : f32
    %245 = vector.broadcast %cst_82 : f32 to vector<8x1xf32>
    %246 = arith.divf %244, %245 : vector<8x1xf32>
    %247 = arith.mulf %240, %240 : vector<8x32xf32>
    %cst_83 = arith.constant dense<0.000000e+00> : vector<8xf32>
    %248 = vector.multi_reduction <add>, %247, %cst_83 [1] : vector<8x32xf32> to vector<8xf32>
    %249 = vector.shape_cast %248 : vector<8xf32> to vector<8x1xf32>
    %cst_84 = arith.constant 3.200000e+01 : f32
    %250 = vector.broadcast %cst_84 : f32 to vector<8x1xf32>
    %251 = arith.divf %249, %250 : vector<8x1xf32>
    %252 = arith.mulf %246, %246 : vector<8x1xf32>
    %253 = arith.subf %251, %252 : vector<8x1xf32>
    %254 = vector.broadcast %246 : vector<8x1xf32> to vector<8x32xf32>
    %255 = arith.subf %240, %254 : vector<8x32xf32>
    %cst_85 = arith.constant 9.99999996E-13 : f32
    %256 = vector.broadcast %cst_85 : f32 to vector<8x1xf32>
    %257 = arith.addf %253, %256 : vector<8x1xf32>
    %258 = math.rsqrt %257 : vector<8x1xf32>
    %259 = vector.broadcast %258 : vector<8x1xf32> to vector<8x32xf32>
    %260 = arith.mulf %255, %259 : vector<8x32xf32>
    %261 = vector.broadcast %241 : vector<1x32xf32> to vector<8x32xf32>
    %262 = arith.mulf %260, %261 : vector<8x32xf32>
    %263 = vector.broadcast %242 : vector<1x32xf32> to vector<8x32xf32>
    %264 = arith.addf %262, %263 : vector<8x32xf32>
    %265 = arith.truncf %264 : vector<8x32xf32> to vector<8x32xbf16>
    %c1_86 = arith.constant 1 : index
    %c0_87 = arith.constant 0 : index
    %c0_88 = arith.constant 0 : index
    %266 = vector.load %arg5[%c1_86, %c0_87, %c0_88] : memref<2x32x64xbf16, #tpu.memory_space<vmem>>, vector<1x32x64xbf16>
    %267 = vector.shape_cast %266 : vector<1x32x64xbf16> to vector<32x64xbf16>
    %cst_89 = arith.constant dense<0.000000e+00> : vector<8x64xf32>
    %268 = tpu.matmul %265, %267, %cst_89 {dimension_numbers = #tpu.dot_dimension_numbers<[1], [0], [0], [1], [0, 0, 1, 1], [], []>} : vector<8x32xbf16>, vector<32x64xbf16>, vector<8x64xf32> -> vector<8x64xf32>
    %269 = vector.extract_strided_slice %176 {offsets = [4, 0], sizes = [1, 64], strides = [1, 1]} : vector<8x128xf32> to vector<1x64xf32>
    %270 = vector.broadcast %269 : vector<1x64xf32> to vector<8x64xf32>
    %271 = arith.addf %268, %270 : vector<8x64xf32>
    %272 = arith.mulf %271, %271 : vector<8x64xf32>
    %273 = arith.mulf %271, %272 : vector<8x64xf32>
    %cst_90 = arith.constant 4.471500e-02 : f32
    %274 = vector.broadcast %cst_90 : f32 to vector<8x64xf32>
    %275 = arith.mulf %274, %273 : vector<8x64xf32>
    %276 = arith.addf %271, %275 : vector<8x64xf32>
    %cst_91 = arith.constant 0.797884583 : f32
    %277 = vector.broadcast %cst_91 : f32 to vector<8x64xf32>
    %278 = arith.mulf %277, %276 : vector<8x64xf32>
    %279 = math.tanh %278 : vector<8x64xf32>
    %cst_92 = arith.constant 1.000000e+00 : f32
    %280 = vector.broadcast %cst_92 : f32 to vector<8x64xf32>
    %281 = arith.addf %280, %279 : vector<8x64xf32>
    %cst_93 = arith.constant 5.000000e-01 : f32
    %282 = vector.broadcast %cst_93 : f32 to vector<8x64xf32>
    %283 = arith.mulf %282, %281 : vector<8x64xf32>
    %284 = arith.mulf %271, %283 : vector<8x64xf32>
    %285 = arith.truncf %284 : vector<8x64xf32> to vector<8x64xbf16>
    %c1_94 = arith.constant 1 : index
    %c0_95 = arith.constant 0 : index
    %c0_96 = arith.constant 0 : index
    %286 = vector.load %arg6[%c1_94, %c0_95, %c0_96] : memref<2x64x32xbf16, #tpu.memory_space<vmem>>, vector<1x64x32xbf16>
    %287 = vector.shape_cast %286 : vector<1x64x32xbf16> to vector<64x32xbf16>
    %cst_97 = arith.constant dense<0.000000e+00> : vector<8x32xf32>
    %288 = tpu.matmul %285, %287, %cst_97 {dimension_numbers = #tpu.dot_dimension_numbers<[1], [0], [0], [1], [0, 0, 1, 1], [], []>} : vector<8x64xbf16>, vector<64x32xbf16>, vector<8x32xf32> -> vector<8x32xf32>
    %289 = vector.extract_strided_slice %176 {offsets = [5, 0], sizes = [1, 32], strides = [1, 1]} : vector<8x128xf32> to vector<1x32xf32>
    %290 = vector.broadcast %289 : vector<1x32xf32> to vector<8x32xf32>
    %291 = arith.addf %288, %290 : vector<8x32xf32>
    %292 = arith.addf %264, %291 : vector<8x32xf32>
    %293 = vector.extract_strided_slice %176 {offsets = [6, 0], sizes = [1, 32], strides = [1, 1]} : vector<8x128xf32> to vector<1x32xf32>
    %294 = vector.extract_strided_slice %176 {offsets = [7, 0], sizes = [1, 32], strides = [1, 1]} : vector<8x128xf32> to vector<1x32xf32>
    %cst_98 = arith.constant dense<0.000000e+00> : vector<8xf32>
    %295 = vector.multi_reduction <add>, %292, %cst_98 [1] : vector<8x32xf32> to vector<8xf32>
    %296 = vector.shape_cast %295 : vector<8xf32> to vector<8x1xf32>
    %cst_99 = arith.constant 3.200000e+01 : f32
    %297 = vector.broadcast %cst_99 : f32 to vector<8x1xf32>
    %298 = arith.divf %296, %297 : vector<8x1xf32>
    %299 = arith.mulf %292, %292 : vector<8x32xf32>
    %cst_100 = arith.constant dense<0.000000e+00> : vector<8xf32>
    %300 = vector.multi_reduction <add>, %299, %cst_100 [1] : vector<8x32xf32> to vector<8xf32>
    %301 = vector.shape_cast %300 : vector<8xf32> to vector<8x1xf32>
    %cst_101 = arith.constant 3.200000e+01 : f32
    %302 = vector.broadcast %cst_101 : f32 to vector<8x1xf32>
    %303 = arith.divf %301, %302 : vector<8x1xf32>
    %304 = arith.mulf %298, %298 : vector<8x1xf32>
    %305 = arith.subf %303, %304 : vector<8x1xf32>
    %306 = vector.broadcast %298 : vector<8x1xf32> to vector<8x32xf32>
    %307 = arith.subf %292, %306 : vector<8x32xf32>
    %cst_102 = arith.constant 9.99999996E-13 : f32
    %308 = vector.broadcast %cst_102 : f32 to vector<8x1xf32>
    %309 = arith.addf %305, %308 : vector<8x1xf32>
    %310 = math.rsqrt %309 : vector<8x1xf32>
    %311 = vector.broadcast %310 : vector<8x1xf32> to vector<8x32xf32>
    %312 = arith.mulf %307, %311 : vector<8x32xf32>
    %313 = vector.broadcast %293 : vector<1x32xf32> to vector<8x32xf32>
    %314 = arith.mulf %312, %313 : vector<8x32xf32>
    %315 = vector.broadcast %294 : vector<1x32xf32> to vector<8x32xf32>
    %316 = arith.addf %314, %315 : vector<8x32xf32>
    %317 = arith.truncf %316 : vector<8x32xf32> to vector<8x32xbf16>
    %c0_103 = arith.constant 0 : index
    %c0_104 = arith.constant 0 : index
    %318 = vector.load %arg8[%c0_103, %c0_104] : memref<32x128xbf16, #tpu.memory_space<vmem>>, vector<32x128xbf16>
    %cst_105 = arith.constant dense<0.000000e+00> : vector<8x128xf32>
    %319 = tpu.matmul %317, %318, %cst_105 {dimension_numbers = #tpu.dot_dimension_numbers<[1], [0], [0], [1], [0, 0, 1, 1], [], []>} : vector<8x32xbf16>, vector<32x128xbf16>, vector<8x128xf32> -> vector<8x128xf32>
    %320 = vector.extract_strided_slice %2 {offsets = [2, 0], sizes = [1, 128], strides = [1, 1]} : vector<8x128xf32> to vector<1x128xf32>
    %321 = vector.broadcast %320 : vector<1x128xf32> to vector<8x128xf32>
    %322 = arith.addf %319, %321 : vector<8x128xf32>
    %c0_106 = arith.constant 0 : index
    %c0_107 = arith.constant 0 : index
    %c0_108 = arith.constant 0 : index
    %323 = vector.load %arg10[%c0_106, %c0_107, %c0_108] : memref<1x8x128xf32, #tpu.memory_space<vmem>>, vector<1x8x128xf32>
    %324 = vector.shape_cast %323 : vector<1x8x128xf32> to vector<8x128xf32>
    %325 = vector.shape_cast %322 : vector<8x128xf32> to vector<1x8x128xf32>
    tpu.vector_store %arg10[%c0_106, %c0_107, %c0_108], %325 {strides = array<i32>} : memref<1x8x128xf32, #tpu.memory_space<vmem>>, vector<1x8x128xf32>,
    return
  }
  func.func @transform_0(%arg0: i32) -> (i32, i32, i32) {
    %c0_i32 = arith.constant 0 : i32
    %c0_i32_0 = arith.constant 0 : i32
    %c0_i32_1 = arith.constant 0 : i32
    return %arg0, %c0_i32, %c0_i32_0 : i32, i32, i32
  }
  func.func @transform_1(%arg0: i32) -> (i32, i32, i32) {
    %c0_i32 = arith.constant 0 : i32
    %c0_i32_0 = arith.constant 0 : i32
    %c0_i32_1 = arith.constant 0 : i32
    return %arg0, %c0_i32, %c0_i32_0 : i32, i32, i32
  }
  func.func @transform_2(%arg0: i32) -> (i32, i32, i32) {
    %c0_i32 = arith.constant 0 : i32
    %c0_i32_0 = arith.constant 0 : i32
    %c0_i32_1 = arith.constant 0 : i32
    %c0_i32_2 = arith.constant 0 : i32
    return %c0_i32, %c0_i32_0, %c0_i32_1 : i32, i32, i32
  }
  func.func @transform_3(%arg0: i32) -> (i32, i32, i32) {
    %c0_i32 = arith.constant 0 : i32
    %c0_i32_0 = arith.constant 0 : i32
    %c0_i32_1 = arith.constant 0 : i32
    %c0_i32_2 = arith.constant 0 : i32
    return %c0_i32, %c0_i32_0, %c0_i32_1 : i32, i32, i32
  }
  func.func @transform_4(%arg0: i32) -> (i32, i32, i32) {
    %c0_i32 = arith.constant 0 : i32
    %c0_i32_0 = arith.constant 0 : i32
    %c0_i32_1 = arith.constant 0 : i32
    %c0_i32_2 = arith.constant 0 : i32
    return %c0_i32, %c0_i32_0, %c0_i32_1 : i32, i32, i32
  }
  func.func @transform_5(%arg0: i32) -> (i32, i32, i32) {
    %c0_i32 = arith.constant 0 : i32
    %c0_i32_0 = arith.constant 0 : i32
    %c0_i32_1 = arith.constant 0 : i32
    %c0_i32_2 = arith.constant 0 : i32
    return %c0_i32, %c0_i32_0, %c0_i32_1 : i32, i32, i32
  }
  func.func @transform_6(%arg0: i32) -> (i32, i32, i32) {
    %c0_i32 = arith.constant 0 : i32
    %c0_i32_0 = arith.constant 0 : i32
    %c0_i32_1 = arith.constant 0 : i32
    %c0_i32_2 = arith.constant 0 : i32
    return %c0_i32, %c0_i32_0, %c0_i32_1 : i32, i32, i32
  }
  func.func @transform_7(%arg0: i32) -> (i32, i32) {
    %c0_i32 = arith.constant 0 : i32
    %c0_i32_0 = arith.constant 0 : i32
    %c0_i32_1 = arith.constant 0 : i32
    return %c0_i32, %c0_i32_0 : i32, i32
  }
  func.func @transform_8(%arg0: i32) -> (i32, i32) {
    %c0_i32 = arith.constant 0 : i32
    %c0_i32_0 = arith.constant 0 : i32
    %c0_i32_1 = arith.constant 0 : i32
    return %c0_i32, %c0_i32_0 : i32, i32
  }
  func.func @transform_9(%arg0: i32) -> (i32, i32, i32) {
    %c0_i32 = arith.constant 0 : i32
    %c0_i32_0 = arith.constant 0 : i32
    %c0_i32_1 = arith.constant 0 : i32
    return %arg0, %c0_i32, %c0_i32_0 : i32, i32, i32
  }
}

</mosaic_0001>

<llo_original>
// kernel: forward.1
$region0: #{forward.1}
  #allocation0 [shape = 'u32[]', space=smem, size = 0x4, offset = 0x4, fixed_abs, tag = 'smem constant byte address 0x4 - core index']
  #allocation1 [shape = 'u32[144,128]{1,0:T(1,128)}', space=vmem, size = 0x12000, scoped, tag = 'internal scratch']
  %s0 = inlined_call_operand.vmem [shape: f32[2,8,32], index: 0, kind: input, shape index: {}]
  %s1 = inlined_call_operand.vmem [shape: f32[2,1,128], index: 1, kind: input, shape index: {}]
  %s2 = inlined_call_operand.vmem [shape: bf16[2,32,96], index: 2, kind: input, shape index: {}]
  %s3 = inlined_call_operand.vmem [shape: bf16[2,32,32], index: 3, kind: input, shape index: {}]
  %s4 = inlined_call_operand.vmem [shape: bf16[2,32,64], index: 4, kind: input, shape index: {}]
  %s5 = inlined_call_operand.vmem [shape: bf16[2,64,32], index: 5, kind: input, shape index: {}]
  %s6 = inlined_call_operand.vmem [shape: f32[2,8,128], index: 6, kind: input, shape index: {}]
  %s7 = inlined_call_operand.vmem [shape: bf16[32,128], index: 7, kind: input, shape index: {}]
  %s8 = inlined_call_operand.vmem [shape: f32[8,128], index: 8, kind: input, shape index: {}]
  %s9 = inlined_call_operand.vmem [shape: f32[2,8,128], index: 9, kind: output, shape index: {}]
  %s10 = sld [smem:[#allocation0]]
  $region69: #{forward.1} parent=0
    _
  %s12 = ssub.s32 1, %s10
  %s13 = scalar_select 0, %s12, %s10
  loop: start=0, step=1, limit=4
  $region2: #{forward.1} parent=0 // loop_pre_header
    _
  $region3: #{forward.1} parent=0 // loop_header
    %s15 = sphi 0, %s19
    %p16 = scmp.ge.s32.totalorder %s15, 4
    %s25 = sphi 0, %s27
    %s28 = sphi 0, %s25
    %s29 = sphi 0, %s28
    %s45 = sphi 0, %s29
    %s51 = sphi 0, %s53
    %s54 = sphi 0, %s51
    %s55 = sphi 0, %s54
    %s71 = sphi 0, %s55
    %s75 = sphi 0, %s75
    %s77 = sphi 0, %s75
    %s78 = sphi 0, %s77
    %s92 = sphi 0, %s78
    %s96 = sphi 0, %s96
    %s98 = sphi 0, %s96
    %s99 = sphi 0, %s98
    %s113 = sphi 0, %s99
    %s117 = sphi 0, %s117
    %s119 = sphi 0, %s117
    %s120 = sphi 0, %s119
    %s134 = sphi 0, %s120
    %s138 = sphi 0, %s138
    %s140 = sphi 0, %s138
    %s141 = sphi 0, %s140
    %s155 = sphi 0, %s141
    %s159 = sphi 0, %s159
    %s161 = sphi 0, %s159
    %s162 = sphi 0, %s161
    %s176 = sphi 0, %s162
    %s180 = sphi 0, %s180
    %s182 = sphi 0, %s180
    %s183 = sphi 0, %s182
    %s197 = sphi 0, %s183
    %s201 = sphi 0, %s201
    %s203 = sphi 0, %s201
    %s204 = sphi 0, %s203
    %s218 = sphi 0, %s204
    %s224 = sphi 0, %s226
    %s227 = sphi 0, %s224
    %s228 = sphi 0, %s227
    %s244 = sphi 0, %s228
  $region4: #{forward.1} parent=0 // loop_header_branch
    %18 = sbr.rel (%p16) target = $region8
  $region5: #{forward.1} parent=0 // loop_body
    %s20 = ssub.s32 %s15, 1
    %s21 = ssub.s32 %s15, 2
    %s22 = sadd.s32 %s15, 1
    %s23 = ssub.s32 %s15, %s22
    %p24 = scmp.eq.s32.totalorder %s23, 0
    %s26 = sadd.s32 %s25, 1
    %s27 = scalar_select %p24, %s25, %s26
    %p30 = pneg %p24
    %p31 = scmp.eq.s32.totalorder %s15, 1
    %p32 = por %p30, %p31
    %p33 = scmp.ne.s32.totalorder %s25, %s28
    %p34 = scmp.eq.s32.totalorder %s15, 0
    %p35 = por %p33, %p34
    %p36 = scmp.ne.s32.totalorder %s25, %s28
    %p37 = scmp.eq.s32.totalorder %s20, 1
    %p38 = por %p36, %p37
    %p39 = scmp.ne.s32.totalorder %s28, %s29
    %p40 = scmp.eq.s32.totalorder %s20, 0
    %p41 = por %p39, %p40
    %p42 = scmp.ne.s32.totalorder %s28, %s29
    %p43 = scmp.eq.s32.totalorder %s21, 1
    %p44 = por %p42, %p43
    %p46 = scmp.ne.s32.totalorder %s29, %s45
    %p47 = scmp.eq.s32.totalorder %s21, 0
    %p48 = por %p46, %p47
    %s49 = ssub.s32 %s15, %s22
    %p50 = scmp.eq.s32.totalorder %s49, 0
    %s52 = sadd.s32 %s51, 1
    %s53 = scalar_select %p50, %s51, %s52
    %p56 = pneg %p50
    %p57 = scmp.eq.s32.totalorder %s15, 1
    %p58 = por %p56, %p57
    %p59 = scmp.ne.s32.totalorder %s51, %s54
    %p60 = scmp.eq.s32.totalorder %s15, 0
    %p61 = por %p59, %p60
    %p62 = scmp.ne.s32.totalorder %s51, %s54
    %p63 = scmp.eq.s32.totalorder %s20, 1
    %p64 = por %p62, %p63
    %p65 = scmp.ne.s32.totalorder %s54, %s55
    %p66 = scmp.eq.s32.totalorder %s20, 0
    %p67 = por %p65, %p66
    %p68 = scmp.ne.s32.totalorder %s54, %s55
    %p69 = scmp.eq.s32.totalorder %s21, 1
    %p70 = por %p68, %p69
    %p72 = scmp.ne.s32.totalorder %s55, %s71
    %p73 = scmp.eq.s32.totalorder %s21, 0
    %p74 = por %p72, %p73
    %s76 = sadd.s32 %s75, 1
    %p79 = scmp.eq.s32.totalorder %s15, 1
    %p80 = scmp.ne.s32.totalorder %s75, %s77
    %p81 = scmp.eq.s32.totalorder %s15, 0
    %p82 = por %p80, %p81
    %p83 = scmp.ne.s32.totalorder %s75, %s77
    %p84 = scmp.eq.s32.totalorder %s20, 1
    %p85 = por %p83, %p84
    %p86 = scmp.ne.s32.totalorder %s77, %s78
    %p87 = scmp.eq.s32.totalorder %s20, 0
    %p88 = por %p86, %p87
    %p89 = scmp.ne.s32.totalorder %s77, %s78
    %p90 = scmp.eq.s32.totalorder %s21, 1
    %p91 = por %p89, %p90
    %p93 = scmp.ne.s32.totalorder %s78, %s92
    %p94 = scmp.eq.s32.totalorder %s21, 0
    %p95 = por %p93, %p94
    %s97 = sadd.s32 %s96, 1
    %p100 = scmp.eq.s32.totalorder %s15, 1
    %p101 = scmp.ne.s32.totalorder %s96, %s98
    %p102 = scmp.eq.s32.totalorder %s15, 0
    %p103 = por %p101, %p102
    %p104 = scmp.ne.s32.totalorder %s96, %s98
    %p105 = scmp.eq.s32.totalorder %s20, 1
    %p106 = por %p104, %p105
    %p107 = scmp.ne.s32.totalorder %s98, %s99
    %p108 = scmp.eq.s32.totalorder %s20, 0
    %p109 = por %p107, %p108
    %p110 = scmp.ne.s32.totalorder %s98, %s99
    %p111 = scmp.eq.s32.totalorder %s21, 1
    %p112 = por %p110, %p111
    %p114 = scmp.ne.s32.totalorder %s99, %s113
    %p115 = scmp.eq.s32.totalorder %s21, 0
    %p116 = por %p114, %p115
    %s118 = sadd.s32 %s117, 1
    %p121 = scmp.eq.s32.totalorder %s15, 1
    %p122 = scmp.ne.s32.totalorder %s117, %s119
    %p123 = scmp.eq.s32.totalorder %s15, 0
    %p124 = por %p122, %p123
    %p125 = scmp.ne.s32.totalorder %s117, %s119
    %p126 = scmp.eq.s32.totalorder %s20, 1
    %p127 = por %p125, %p126
    %p128 = scmp.ne.s32.totalorder %s119, %s120
    %p129 = scmp.eq.s32.totalorder %s20, 0
    %p130 = por %p128, %p129
    %p131 = scmp.ne.s32.totalorder %s119, %s120
    %p132 = scmp.eq.s32.totalorder %s21, 1
    %p133 = por %p131, %p132
    %p135 = scmp.ne.s32.totalorder %s120, %s134
    %p136 = scmp.eq.s32.totalorder %s21, 0
    %p137 = por %p135, %p136
    %s139 = sadd.s32 %s138, 1
    %p142 = scmp.eq.s32.totalorder %s15, 1
    %p143 = scmp.ne.s32.totalorder %s138, %s140
    %p144 = scmp.eq.s32.totalorder %s15, 0
    %p145 = por %p143, %p144
    %p146 = scmp.ne.s32.totalorder %s138, %s140
    %p147 = scmp.eq.s32.totalorder %s20, 1
    %p148 = por %p146, %p147
    %p149 = scmp.ne.s32.totalorder %s140, %s141
    %p150 = scmp.eq.s32.totalorder %s20, 0
    %p151 = por %p149, %p150
    %p152 = scmp.ne.s32.totalorder %s140, %s141
    %p153 = scmp.eq.s32.totalorder %s21, 1
    %p154 = por %p152, %p153
    %p156 = scmp.ne.s32.totalorder %s141, %s155
    %p157 = scmp.eq.s32.totalorder %s21, 0
    %p158 = por %p156, %p157
    %s160 = sadd.s32 %s159, 1
    %p163 = scmp.eq.s32.totalorder %s15, 1
    %p164 = scmp.ne.s32.totalorder %s159, %s161
    %p165 = scmp.eq.s32.totalorder %s15, 0
    %p166 = por %p164, %p165
    %p167 = scmp.ne.s32.totalorder %s159, %s161
    %p168 = scmp.eq.s32.totalorder %s20, 1
    %p169 = por %p167, %p168
    %p170 = scmp.ne.s32.totalorder %s161, %s162
    %p171 = scmp.eq.s32.totalorder %s20, 0
    %p172 = por %p170, %p171
    %p173 = scmp.ne.s32.totalorder %s161, %s162
    %p174 = scmp.eq.s32.totalorder %s21, 1
    %p175 = por %p173, %p174
    %p177 = scmp.ne.s32.totalorder %s162, %s176
    %p178 = scmp.eq.s32.totalorder %s21, 0
    %p179 = por %p177, %p178
    %s181 = sadd.s32 %s180, 1
    %p184 = scmp.eq.s32.totalorder %s15, 1
    %p185 = scmp.ne.s32.totalorder %s180, %s182
    %p186 = scmp.eq.s32.totalorder %s15, 0
    %p187 = por %p185, %p186
    %p188 = scmp.ne.s32.totalorder %s180, %s182
    %p189 = scmp.eq.s32.totalorder %s20, 1
    %p190 = por %p188, %p189
    %p191 = scmp.ne.s32.totalorder %s182, %s183
    %p192 = scmp.eq.s32.totalorder %s20, 0
    %p193 = por %p191, %p192
    %p194 = scmp.ne.s32.totalorder %s182, %s183
    %p195 = scmp.eq.s32.totalorder %s21, 1
    %p196 = por %p194, %p195
    %p198 = scmp.ne.s32.totalorder %s183, %s197
    %p199 = scmp.eq.s32.totalorder %s21, 0
    %p200 = por %p198, %p199
    %s202 = sadd.s32 %s201, 1
    %p205 = scmp.eq.s32.totalorder %s15, 1
    %p206 = scmp.ne.s32.totalorder %s201, %s203
    %p207 = scmp.eq.s32.totalorder %s15, 0
    %p208 = por %p206, %p207
    %p209 = scmp.ne.s32.totalorder %s201, %s203
    %p210 = scmp.eq.s32.totalorder %s20, 1
    %p211 = por %p209, %p210
    %p212 = scmp.ne.s32.totalorder %s203, %s204
    %p213 = scmp.eq.s32.totalorder %s20, 0
    %p214 = por %p212, %p213
    %p215 = scmp.ne.s32.totalorder %s203, %s204
    %p216 = scmp.eq.s32.totalorder %s21, 1
    %p217 = por %p215, %p216
    %p219 = scmp.ne.s32.totalorder %s204, %s218
    %p220 = scmp.eq.s32.totalorder %s21, 0
    %p221 = por %p219, %p220
    %s222 = ssub.s32 %s15, %s22
    %p223 = scmp.eq.s32.totalorder %s222, 0
    %s225 = sadd.s32 %s224, 1
    %s226 = scalar_select %p223, %s224, %s225
    %p229 = pneg %p223
    %p230 = scmp.eq.s32.totalorder %s15, 1
    %p231 = por %p229, %p230
    %p232 = scmp.ne.s32.totalorder %s224, %s227
    %p233 = scmp.eq.s32.totalorder %s15, 0
    %p234 = por %p232, %p233
    %p235 = scmp.ne.s32.totalorder %s224, %s227
    %p236 = scmp.eq.s32.totalorder %s20, 1
    %p237 = por %p235, %p236
    %p238 = scmp.ne.s32.totalorder %s227, %s228
    %p239 = scmp.eq.s32.totalorder %s20, 0
    %p240 = por %p238, %p239
    %p241 = scmp.ne.s32.totalorder %s227, %s228
    %p242 = scmp.eq.s32.totalorder %s21, 1
    %p243 = por %p241, %p242
    %p245 = scmp.ne.s32.totalorder %s228, %s244
    %p246 = scmp.eq.s32.totalorder %s21, 0
    %p247 = por %p245, %p246
    %p248 = scmp.le.s32.totalorder 1, %s15
    %p249 = scmp.lt.s32.totalorder %s15, 3
    %p250 = pnand %p248, %p249
    %p251 = pneg %p250
    // Predicated region
    $region9: #{forward.1} parent=5 // pred_check
      _
    $region10: #{forward.1} parent=5 // pred_check_branch
      %253 = sbr.rel (%p250) target = $region12
    $region11: #{forward.1} parent=5 // pred_region
      %s254 = ssub.s32 %s15, 1
      // Predicated region
      $region13: #{forward.1} parent=11 // pred_check
        %p255 = pneg %p88
      $region14: #{forward.1} parent=11 // pred_check_branch
        %257 = sbr.rel (%p255) target = $region16
      $region15: #{forward.1} parent=11 // pred_region
        _
      $region16: #{forward.1} parent=11 // pred_fallthru
        _
      // Predicated region
      $region17: #{forward.1} parent=11 // pred_check
        %p258 = pneg %p109
      $region18: #{forward.1} parent=11 // pred_check_branch
        %260 = sbr.rel (%p258) target = $region20
      $region19: #{forward.1} parent=11 // pred_region
        _
      $region20: #{forward.1} parent=11 // pred_fallthru
        _
      // Predicated region
      $region21: #{forward.1} parent=11 // pred_check
        %p261 = pneg %p130
      $region22: #{forward.1} parent=11 // pred_check_branch
        %263 = sbr.rel (%p261) target = $region24
      $region23: #{forward.1} parent=11 // pred_region
        _
      $region24: #{forward.1} parent=11 // pred_fallthru
        _
      // Predicated region
      $region25: #{forward.1} parent=11 // pred_check
        %p264 = pneg %p151
      $region26: #{forward.1} parent=11 // pred_check_branch
        %266 = sbr.rel (%p264) target = $region28
      $region27: #{forward.1} parent=11 // pred_region
        _
      $region28: #{forward.1} parent=11 // pred_fallthru
        _
      // Predicated region
      $region29: #{forward.1} parent=11 // pred_check
        %p267 = pneg %p172
      $region30: #{forward.1} parent=11 // pred_check_branch
        %269 = sbr.rel (%p267) target = $region32
      $region31: #{forward.1} parent=11 // pred_region
        _
      $region32: #{forward.1} parent=11 // pred_fallthru
        _
      // Predicated region
      $region33: #{forward.1} parent=11 // pred_check
        %p270 = pneg %p193
      $region34: #{forward.1} parent=11 // pred_check_branch
        %272 = sbr.rel (%p270) target = $region36
      $region35: #{forward.1} parent=11 // pred_region
        _
      $region36: #{forward.1} parent=11 // pred_fallthru
        _
      // Predicated region
      $region37: #{forward.1} parent=11 // pred_check
        %p273 = pneg %p214
      $region38: #{forward.1} parent=11 // pred_check_branch
        %275 = sbr.rel (%p273) target = $region40
      $region39: #{forward.1} parent=11 // pred_region
        _
      $region40: #{forward.1} parent=11 // pred_fallthru
        _
    $region12: #{forward.1} parent=5 // pred_fallthru
      _
    %p276 = scmp.lt.s32.totalorder %s15, 2
    // Predicated region
    $region41: #{forward.1} parent=5 // pred_check
      %p277 = pneg %p276
    $region42: #{forward.1} parent=5 // pred_check_branch
      %279 = sbr.rel (%p277) target = $region44
    $region43: #{forward.1} parent=5 // pred_region
      // Predicated region
      $region45: #{forward.1} parent=43 // pred_check
        %p280 = pneg %p35
      $region46: #{forward.1} parent=43 // pred_check_branch
        %282 = sbr.rel (%p280) target = $region48
      $region47: #{forward.1} parent=43 // pred_region
        %p283 = scmp.lt.s32.totalorder %s15, 1
        %s284 = scalar_select %p283, %s15, 1
        %s285 = smul.addr %s284, 8
        %s286 = scalar_lea.vmem %s0, %s285
      $region48: #{forward.1} parent=43 // pred_fallthru
        _
      // Predicated region
      $region49: #{forward.1} parent=43 // pred_check
        %p287 = pneg %p61
      $region50: #{forward.1} parent=43 // pred_check_branch
        %289 = sbr.rel (%p287) target = $region52
      $region51: #{forward.1} parent=43 // pred_region
        %p290 = scmp.lt.s32.totalorder %s15, 1
        %s291 = scalar_select %p290, %s15, 1
        %s292 = scalar_lea.vmem %s1, %s291
      $region52: #{forward.1} parent=43 // pred_fallthru
        _
    $region44: #{forward.1} parent=5 // pred_fallthru
      _
    %p293 = scmp.le.s32.totalorder 1, %s15
    %p294 = scmp.lt.s32.totalorder %s15, 3
    %p295 = pnand %p293, %p294
    %p296 = pneg %p295
    // Predicated region
    $region53: #{forward.1} parent=5 // pred_check
      _
    $region54: #{forward.1} parent=5 // pred_check_branch
      %298 = sbr.rel (%p295) target = $region56
    $region55: #{forward.1} parent=5 // pred_region
      %s299 = ssub.s32 %s15, 1
      %p300 = scmp.lt.s32.totalorder %s20, 1
      %s301 = scalar_select %p300, %s20, 1
      %s302 = smul.addr %s301, 8
      %s303 = scalar_lea.vmem %s0, %s302
      %p304 = pneg %p41
      %p305 = pneg %p38
      %p306 = scmp.lt.s32.totalorder %s20, 1
      %s307 = scalar_select %p306, %s20, 1
      %s308 = scalar_lea.vmem %s1, %s307
      %p309 = pneg %p67
      %p310 = pneg %p64
      %p311 = pneg %p88
      %p312 = pneg %p85
      %p313 = pneg %p109
      %p314 = pneg %p106
      %p315 = pneg %p130
      %p316 = pneg %p127
      %p317 = pneg %p151
      %p318 = pneg %p148
      %p319 = pneg %p172
      %p320 = pneg %p169
      %p321 = pneg %p193
      %p322 = pneg %p190
      %p323 = pneg %p214
      %p324 = pneg %p211
      %p325 = pneg %p240
      %p326 = pneg %p237
      %p327 = scmp.lt.s32.totalorder %s20, 1
      %s328 = scalar_select %p327, %s20, 1
      %s329 = smul.addr %s328, 8
      %s330 = scalar_lea.vmem %s9, %s329
      %p331 = scmp.lt.s32.totalorder %s20, 1
      %s332 = scalar_select %p331, %s20, 1
      %s333 = smul.addr %s332, 8
      %s334 = scalar_lea.vmem %s0, %s333
      %p335 = scmp.lt.s32.totalorder %s20, 1
      %s336 = scalar_select %p335, %s20, 1
      %s337 = scalar_lea.vmem %s1, %s336
      %p338 = scmp.lt.s32.totalorder %s20, 1
      %s339 = scalar_select %p338, %s20, 1
      %s340 = smul.addr %s339, 8
      %s341 = scalar_lea.vmem %s9, %s340
      %v343 = vld [vmem:[%s334] sm:$0xff]
      %v344 = vld [vmem:[%s8] sm:$0xff]
      %v345 = vld [vmem:[%s337] sm:$0x1]
      %v346 = vsub.f32 %v345, 1.0
      %v347 = vmul.f32 %v346, 1e+09
      %vm348 = vcmask 261120
      %v349 = vsel %vm348, %v343, 0.0
      %350 = vadd.xlane.f32.xlu0 %v349
      %v351 = vpop.xlane.xlu0 %350
      %v352 = vrcp.pop 32.0
      %v353 = vmul.f32 %v351, %v352
      %v354 = vmul.f32 %v343, %v343
      %v355 = vsel %vm348, %v354, 0.0
      %356 = vadd.xlane.f32.xlu0 %v355
      %v357 = vpop.xlane.xlu0 %356
      %v358 = vmul.f32 %v357, %v352
      %v359 = vmul.f32 %v353, %v353
      %v360 = vsub.f32 %v358, %v359
      %v361 = vsub.f32 %v343, %v353
      %v362 = vadd.f32 %v360, 1e-12
      %v363 = vrsqrt.pop %v362
      %v364 = vmul.f32 %v361, %v363
      %v365 = vlaneseq
      %v366 = vshrl.u32 %v365, 7
      %v367 = vsub.s32 0, %v366
      %v368 = vrot.slane %v344, %v367
      %v369 = vmul.f32 %v364, %v368
      %v370 = vlaneseq
      %v371 = vshrl.u32 %v370, 7
      %v372 = vsub.s32 1, %v371
      %v373 = vrot.slane %v344, %v372
      %v374 = vadd.f32 %v369, %v373
      %v375 = vld [vmem:[%s6] sm:$0xff]
      %v376 = vpack.c.bf16 %v374, %v374
      %v377 = vld [vmem:[%s2] sm:$0xf]
      %v378 = vld [vmem:[%s2 + $0x4] sm:$0xf]
      %v379 = vld [vmem:[%s2 + $0x8] sm:$0xf]
      %v380 = vld [vmem:[%s2 + $0xc] sm:$0xf]
      %v381 = vlaneseq
      %v382 = vshrl.u32 %v381, 7
      %v383 = vsub.s32 0, %v382
      %v384 = vrot.slane %v375, %v383
      %v389 = vunpack.c.l.b16 %v377
      %v390 = vunpack.c.l.b16 %v378
      %v391 = vunpack.c.l.b16 %v379
      %v392 = vunpack.c.l.b16 %v380
      %v393 = vpack.c.b16 %v390, %v389
      %v394 = vpack.c.b16 %v392, %v391
      %v398 = vsel %vm348, %v376, 0
      %400 = vmatprep.subr.bf16.mxu0 0
      %401 = vmatpush1.bf16.msra.mxu0 %v393
      %402 = vmatprep.subr.bf16.mxu0 0
      %403 = vmatpush1.bf16.msra.mxu0 %v394
      %404 = vmatprep.subr.bf16.mxu0 0
      %405 = vmatpush1.bf16.msra.mxu0 0
      %406 = vmatprep.subr.bf16.mxu0 0
      %407 = vmatpush1.bf16.msra.mxu0 0
      %408 = vmatprep.subr.bf16.mxu0 0
      %409 = vmatpush1.bf16.msra.mxu0 0
      %410 = vmatprep.subr.bf16.mxu0 0
      %411 = vmatpush1.bf16.msra.mxu0 0
      %412 = vmatprep.subr.bf16.mxu0 0
      %413 = vmatpush1.bf16.msra.mxu0 0
      %414 = vmatprep.subr.bf16.mxu0 0
      %415 = vmatpush1.bf16.msra.mxu0 0
      %416 = vmatprep.subr.bf16.mxu0 0
      %417 = vmatpush1.bf16.msra.mxu0 0
      %418 = vmatprep.subr.bf16.mxu0 0
      %419 = vmatpush1.bf16.msra.mxu0 0
      %420 = vmatprep.subr.bf16.mxu0 0
      %421 = vmatpush1.bf16.msra.mxu0 0
      %422 = vmatprep.subr.bf16.mxu0 0
      %423 = vmatpush1.bf16.msra.mxu0 0
      %424 = vmatprep.subr.bf16.mxu0 0
      %425 = vmatpush1.bf16.msra.mxu0 0
      %426 = vmatprep.subr.bf16.mxu0 0
      %427 = vmatpush1.bf16.msra.mxu0 0
      %428 = vmatprep.subr.bf16.mxu0 0
      %429 = vmatpush1.bf16.msra.mxu0 0
      %430 = vmatprep.subr.bf16.mxu0 0
      %431 = vmatpush1.bf16.msra.mxu0 0
      %432 = vmatprep.mubr.bf16.mxu0 0
      %433 = vmatmul.mubr.bf16.gmra.mrb[0].mxu0 %v398
      %v434 = vpop.f32.mrb[0].mxu0
      %v435 = vadd.f32 %v384, %v434
      %v436 = vpop.f32.mrb[0].mxu0
      %v437 = vpop.f32.mrb[0].mxu0
      %v438 = vpop.f32.mrb[0].mxu0
      %439 = vdwg.mxu0
      %v440 = vpack.c.bf16 %v435, %v435
      %v442 = vlaneseq
      %v443 = vshrl.u32 %v442, 7
      %v444 = vsub.s32 0, %v443
      %v445 = vrot.slane %v347, %v444
      %448 = vrot.lane.b32.xlu0 %v440, 96
      %v449 = vpop.permute.xlu0 %448
      %vm450 = vcmask 130048
      %v452 = vsel %vm450, %v440, 0
      %v455 = vsel %vm450, %v449, 0
      %457 = vmatprep.subr.bf16.mxu0 0
      %458 = vmatpush1.bf16.xpose.msra.mxu0 %v455
      %459 = vmatprep.subr.bf16.mxu0 0
      %460 = vmatpush1.bf16.xpose.msra.mxu0 0
      %461 = vmatprep.subr.bf16.mxu0 0
      %462 = vmatpush1.bf16.xpose.msra.mxu0 0
      %463 = vmatprep.subr.bf16.mxu0 0
      %464 = vmatpush1.bf16.xpose.msra.mxu0 0
      %465 = vmatprep.subr.bf16.mxu0 0
      %466 = vmatpush1.bf16.xpose.msra.mxu0 0
      %467 = vmatprep.subr.bf16.mxu0 0
      %468 = vmatpush1.bf16.xpose.msra.mxu0 0
      %469 = vmatprep.subr.bf16.mxu0 0
      %470 = vmatpush1.bf16.xpose.msra.mxu0 0
      %471 = vmatprep.subr.bf16.mxu0 0
      %472 = vmatpush1.bf16.xpose.msra.mxu0 0
      %473 = vmatprep.subr.bf16.mxu0 0
      %474 = vmatpush1.bf16.xpose.msra.mxu0 0
      %475 = vmatprep.subr.bf16.mxu0 0
      %476 = vmatpush1.bf16.xpose.msra.mxu0 0
      %477 = vmatprep.subr.bf16.mxu0 0
      %478 = vmatpush1.bf16.xpose.msra.mxu0 0
      %479 = vmatprep.subr.bf16.mxu0 0
      %480 = vmatpush1.bf16.xpose.msra.mxu0 0
      %481 = vmatprep.subr.bf16.mxu0 0
      %482 = vmatpush1.bf16.xpose.msra.mxu0 0
      %483 = vmatprep.subr.bf16.mxu0 0
      %484 = vmatpush1.bf16.xpose.msra.mxu0 0
      %485 = vmatprep.subr.bf16.mxu0 0
      %486 = vmatpush1.bf16.xpose.msra.mxu0 0
      %487 = vmatprep.subr.bf16.mxu0 0
      %488 = vmatpush1.bf16.xpose.msra.mxu0 0
      %489 = vmatprep.mubr.bf16.mxu0 0
      %490 = vmatmul.mubr.bf16.gmra.mrb[0].mxu0 %v452
      %v491 = vpop.f32.mrb[0].mxu0
      %v492 = vadd.f32 %v445, %v491
      %v493 = vpop.f32.mrb[0].mxu0
      %v494 = vpop.f32.mrb[0].mxu0
      %v495 = vpop.f32.mrb[0].mxu0
      %496 = vdwg.mxu0
      %vm497 = vcmask 64512
      %v498 = vsel %vm497, %v492, -inf
      %499 = vmax.xlane.f32.xlu0 %v498
      %v500 = vpop.xlane.xlu0 %499
      %v501 = vsub.f32 %v492, %v500
      %v502 = vmul.f32 %v501, 1.442695
      %v503 = vpow.pop %v502
      %v504 = vsel %vm497, %v503, 0.0
      %505 = vadd.xlane.f32.xlu0 %v504
      %v506 = vpop.xlane.xlu0 %505
      %v507 = vrcp.pop %v506
      %v508 = vmul.f32 %v503, %v507
      %v509 = vpack.c.bf16 %v508, %v508
      %510 = vrot.lane.b32.xlu0 %v440, 64
      %v511 = vpop.permute.xlu0 %510
      %v513 = vsel %vm497, %v509, 0
      %vm515 = vcmask 1043456
      %v517 = vsel %vm515, %v511, 0
      %519 = vmatprep.subr.bf16.mxu0 0
      %520 = vmatpush1.bf16.msra.mxu0 %v517
      %521 = vmatprep.subr.bf16.mxu0 0
      %522 = vmatpush1.bf16.msra.mxu0 0
      %523 = vmatprep.subr.bf16.mxu0 0
      %524 = vmatpush1.bf16.msra.mxu0 0
      %525 = vmatprep.subr.bf16.mxu0 0
      %526 = vmatpush1.bf16.msra.mxu0 0
      %527 = vmatprep.subr.bf16.mxu0 0
      %528 = vmatpush1.bf16.msra.mxu0 0
      %529 = vmatprep.subr.bf16.mxu0 0
      %530 = vmatpush1.bf16.msra.mxu0 0
      %531 = vmatprep.subr.bf16.mxu0 0
      %532 = vmatpush1.bf16.msra.mxu0 0
      %533 = vmatprep.subr.bf16.mxu0 0
      %534 = vmatpush1.bf16.msra.mxu0 0
      %535 = vmatprep.subr.bf16.mxu0 0
      %536 = vmatpush1.bf16.msra.mxu0 0
      %537 = vmatprep.subr.bf16.mxu0 0
      %538 = vmatpush1.bf16.msra.mxu0 0
      %539 = vmatprep.subr.bf16.mxu0 0
      %540 = vmatpush1.bf16.msra.mxu0 0
      %541 = vmatprep.subr.bf16.mxu0 0
      %542 = vmatpush1.bf16.msra.mxu0 0
      %543 = vmatprep.subr.bf16.mxu0 0
      %544 = vmatpush1.bf16.msra.mxu0 0
      %545 = vmatprep.subr.bf16.mxu0 0
      %546 = vmatpush1.bf16.msra.mxu0 0
      %547 = vmatprep.subr.bf16.mxu0 0
      %548 = vmatpush1.bf16.msra.mxu0 0
      %549 = vmatprep.subr.bf16.mxu0 0
      %550 = vmatpush1.bf16.msra.mxu0 0
      %551 = vmatprep.mubr.bf16.mxu0 0
      %552 = vmatmul.mubr.bf16.gmra.mrb[0].mxu0 %v513
      %v553 = vpop.f32.mrb[0].mxu0
      %v554 = vadd.f32 0.0, %v553
      %v555 = vpop.f32.mrb[0].mxu0
      %v556 = vpop.f32.mrb[0].mxu0
      %v557 = vpop.f32.mrb[0].mxu0
      %558 = vdwg.mxu0
      %v559 = vpack.c.bf16 %v554, %v554
      %v560 = vld [vmem:[%s3] sm:$0xf]
      %v561 = vld [vmem:[%s3 + $0x4] sm:$0xf]
      %562 = vrot.lane.b32.xlu0 %v440, 112
      %v563 = vpop.permute.xlu0 %562
      %564 = vrot.lane.b32.xlu0 %v440, 80
      %v565 = vpop.permute.xlu0 %564
      %v567 = vsel %vm450, %v563, 0
      %v570 = vsel %vm450, %v565, 0
      %572 = vmatprep.subr.bf16.mxu0 0
      %573 = vmatpush1.bf16.xpose.msra.mxu0 %v570
      %574 = vmatprep.subr.bf16.mxu0 0
      %575 = vmatpush1.bf16.xpose.msra.mxu0 0
      %576 = vmatprep.subr.bf16.mxu0 0
      %577 = vmatpush1.bf16.xpose.msra.mxu0 0
      %578 = vmatprep.subr.bf16.mxu0 0
      %579 = vmatpush1.bf16.xpose.msra.mxu0 0
      %580 = vmatprep.subr.bf16.mxu0 0
      %581 = vmatpush1.bf16.xpose.msra.mxu0 0
      %582 = vmatprep.subr.bf16.mxu0 0
      %583 = vmatpush1.bf16.xpose.msra.mxu0 0
      %584 = vmatprep.subr.bf16.mxu0 0
      %585 = vmatpush1.bf16.xpose.msra.mxu0 0
      %586 = vmatprep.subr.bf16.mxu0 0
      %587 = vmatpush1.bf16.xpose.msra.mxu0 0
      %588 = vmatprep.subr.bf16.mxu0 0
      %589 = vmatpush1.bf16.xpose.msra.mxu0 0
      %590 = vmatprep.subr.bf16.mxu0 0
      %591 = vmatpush1.bf16.xpose.msra.mxu0 0
      %592 = vmatprep.subr.bf16.mxu0 0
      %593 = vmatpush1.bf16.xpose.msra.mxu0 0
      %594 = vmatprep.subr.bf16.mxu0 0
      %595 = vmatpush1.bf16.xpose.msra.mxu0 0
      %596 = vmatprep.subr.bf16.mxu0 0
      %597 = vmatpush1.bf16.xpose.msra.mxu0 0
      %598 = vmatprep.subr.bf16.mxu0 0
      %599 = vmatpush1.bf16.xpose.msra.mxu0 0
      %600 = vmatprep.subr.bf16.mxu0 0
      %601 = vmatpush1.bf16.xpose.msra.mxu0 0
      %602 = vmatprep.subr.bf16.mxu0 0
      %603 = vmatpush1.bf16.xpose.msra.mxu0 0
      %604 = vmatprep.mubr.bf16.mxu0 0
      %605 = vmatmul.mubr.bf16.gmra.mrb[0].mxu0 %v567
      %v606 = vpop.f32.mrb[0].mxu0
      %v607 = vadd.f32 %v445, %v606
      %v608 = vpop.f32.mrb[0].mxu0
      %v609 = vpop.f32.mrb[0].mxu0
      %v610 = vpop.f32.mrb[0].mxu0
      %611 = vdwg.mxu0
      %v612 = vsel %vm497, %v607, -inf
      %613 = vmax.xlane.f32.xlu0 %v612
      %v614 = vpop.xlane.xlu0 %613
      %v615 = vsub.f32 %v607, %v614
      %v616 = vmul.f32 %v615, 1.442695
      %v617 = vpow.pop %v616
      %v618 = vsel %vm497, %v617, 0.0
      %619 = vadd.xlane.f32.xlu0 %v618
      %v620 = vpop.xlane.xlu0 %619
      %v621 = vrcp.pop %v620
      %v622 = vmul.f32 %v617, %v621
      %v623 = vpack.c.bf16 %v622, %v622
      %624 = vrot.lane.b32.xlu0 %v440, 48
      %v625 = vpop.permute.xlu0 %624
      %v627 = vsel %vm497, %v623, 0
      %v630 = vsel %vm515, %v625, 0
      %632 = vmatprep.subr.bf16.mxu0 0
      %633 = vmatpush1.bf16.msra.mxu0 %v630
      %634 = vmatprep.subr.bf16.mxu0 0
      %635 = vmatpush1.bf16.msra.mxu0 0
      %636 = vmatprep.subr.bf16.mxu0 0
      %637 = vmatpush1.bf16.msra.mxu0 0
      %638 = vmatprep.subr.bf16.mxu0 0
      %639 = vmatpush1.bf16.msra.mxu0 0
      %640 = vmatprep.subr.bf16.mxu0 0
      %641 = vmatpush1.bf16.msra.mxu0 0
      %642 = vmatprep.subr.bf16.mxu0 0
      %643 = vmatpush1.bf16.msra.mxu0 0
      %644 = vmatprep.subr.bf16.mxu0 0
      %645 = vmatpush1.bf16.msra.mxu0 0
      %646 = vmatprep.subr.bf16.mxu0 0
      %647 = vmatpush1.bf16.msra.mxu0 0
      %648 = vmatprep.subr.bf16.mxu0 0
      %649 = vmatpush1.bf16.msra.mxu0 0
      %650 = vmatprep.subr.bf16.mxu0 0
      %651 = vmatpush1.bf16.msra.mxu0 0
      %652 = vmatprep.subr.bf16.mxu0 0
      %653 = vmatpush1.bf16.msra.mxu0 0
      %654 = vmatprep.subr.bf16.mxu0 0
      %655 = vmatpush1.bf16.msra.mxu0 0
      %656 = vmatprep.subr.bf16.mxu0 0
      %657 = vmatpush1.bf16.msra.mxu0 0
      %658 = vmatprep.subr.bf16.mxu0 0
      %659 = vmatpush1.bf16.msra.mxu0 0
      %660 = vmatprep.subr.bf16.mxu0 0
      %661 = vmatpush1.bf16.msra.mxu0 0
      %662 = vmatprep.subr.bf16.mxu0 0
      %663 = vmatpush1.bf16.msra.mxu0 0
      %664 = vmatprep.mubr.bf16.mxu0 0
      %665 = vmatmul.mubr.bf16.gmra.mrb[0].mxu0 %v627
      %v666 = vpop.f32.mrb[0].mxu0
      %v667 = vadd.f32 0.0, %v666
      %v668 = vpop.f32.mrb[0].mxu0
      %v669 = vpop.f32.mrb[0].mxu0
      %v670 = vpop.f32.mrb[0].mxu0
      %671 = vdwg.mxu0
      %v672 = vpack.c.bf16 %v667, %v667
      %v673 = vld [vmem:[%s3 + $0x8] sm:$0xf]
      %v674 = vld [vmem:[%s3 + $0xc] sm:$0xf]
      %v677 = vunpack.c.l.b16 %v673
      %v678 = vunpack.c.l.b16 %v674
      %v679 = vpack.c.b16 %v678, %v677
      %v682 = vsel %vm450, %v672, 0
      %684 = vmatprep.subr.bf16.mxu0 0
      %685 = vmatpush1.bf16.msra.mxu0 %v679
      %686 = vmatprep.subr.bf16.mxu0 0
      %687 = vmatpush1.bf16.msra.mxu0 0
      %688 = vmatprep.subr.bf16.mxu0 0
      %689 = vmatpush1.bf16.msra.mxu0 0
      %690 = vmatprep.subr.bf16.mxu0 0
      %691 = vmatpush1.bf16.msra.mxu0 0
      %692 = vmatprep.subr.bf16.mxu0 0
      %693 = vmatpush1.bf16.msra.mxu0 0
      %694 = vmatprep.subr.bf16.mxu0 0
      %695 = vmatpush1.bf16.msra.mxu0 0
      %696 = vmatprep.subr.bf16.mxu0 0
      %697 = vmatpush1.bf16.msra.mxu0 0
      %698 = vmatprep.subr.bf16.mxu0 0
      %699 = vmatpush1.bf16.msra.mxu0 0
      %700 = vmatprep.subr.bf16.mxu0 0
      %701 = vmatpush1.bf16.msra.mxu0 0
      %702 = vmatprep.subr.bf16.mxu0 0
      %703 = vmatpush1.bf16.msra.mxu0 0
      %704 = vmatprep.subr.bf16.mxu0 0
      %705 = vmatpush1.bf16.msra.mxu0 0
      %706 = vmatprep.subr.bf16.mxu0 0
      %707 = vmatpush1.bf16.msra.mxu0 0
      %708 = vmatprep.subr.bf16.mxu0 0
      %709 = vmatpush1.bf16.msra.mxu0 0
      %710 = vmatprep.subr.bf16.mxu0 0
      %711 = vmatpush1.bf16.msra.mxu0 0
      %712 = vmatprep.subr.bf16.mxu0 0
      %713 = vmatpush1.bf16.msra.mxu0 0
      %714 = vmatprep.subr.bf16.mxu0 0
      %715 = vmatpush1.bf16.msra.mxu0 0
      %716 = vmatprep.mubr.bf16.mxu0 0
      %717 = vmatmul.mubr.bf16.gmra.mrb[0].mxu0 %v682
      %v718 = vpop.f32.mrb[0].mxu0
      %v719 = vadd.f32 0.0, %v718
      %v720 = vpop.f32.mrb[0].mxu0
      %v721 = vpop.f32.mrb[0].mxu0
      %v722 = vpop.f32.mrb[0].mxu0
      %723 = vdwg.mxu0
      %v726 = vunpack.c.l.b16 %v560
      %v727 = vunpack.c.l.b16 %v561
      %v728 = vpack.c.b16 %v727, %v726
      %v731 = vsel %vm450, %v559, 0
      %733 = vmatprep.subr.bf16.mxu0 0
      %734 = vmatpush1.bf16.msra.mxu0 %v728
      %735 = vmatprep.subr.bf16.mxu0 0
      %736 = vmatpush1.bf16.msra.mxu0 0
      %737 = vmatprep.subr.bf16.mxu0 0
      %738 = vmatpush1.bf16.msra.mxu0 0
      %739 = vmatprep.subr.bf16.mxu0 0
      %740 = vmatpush1.bf16.msra.mxu0 0
      %741 = vmatprep.subr.bf16.mxu0 0
      %742 = vmatpush1.bf16.msra.mxu0 0
      %743 = vmatprep.subr.bf16.mxu0 0
      %744 = vmatpush1.bf16.msra.mxu0 0
      %745 = vmatprep.subr.bf16.mxu0 0
      %746 = vmatpush1.bf16.msra.mxu0 0
      %747 = vmatprep.subr.bf16.mxu0 0
      %748 = vmatpush1.bf16.msra.mxu0 0
      %749 = vmatprep.subr.bf16.mxu0 0
      %750 = vmatpush1.bf16.msra.mxu0 0
      %751 = vmatprep.subr.bf16.mxu0 0
      %752 = vmatpush1.bf16.msra.mxu0 0
      %753 = vmatprep.subr.bf16.mxu0 0
      %754 = vmatpush1.bf16.msra.mxu0 0
      %755 = vmatprep.subr.bf16.mxu0 0
      %756 = vmatpush1.bf16.msra.mxu0 0
      %757 = vmatprep.subr.bf16.mxu0 0
      %758 = vmatpush1.bf16.msra.mxu0 0
      %759 = vmatprep.subr.bf16.mxu0 0
      %760 = vmatpush1.bf16.msra.mxu0 0
      %761 = vmatprep.subr.bf16.mxu0 0
      %762 = vmatpush1.bf16.msra.mxu0 0
      %763 = vmatprep.subr.bf16.mxu0 0
      %764 = vmatpush1.bf16.msra.mxu0 0
      %765 = vmatprep.mubr.bf16.mxu0 0
      %766 = vmatmul.mubr.bf16.gmra.mrb[0].mxu0 %v731
      %v767 = vpop.f32.mrb[0].mxu0
      %v768 = vadd.f32 %v719, %v767
      %v769 = vpop.f32.mrb[0].mxu0
      %v770 = vpop.f32.mrb[0].mxu0
      %v771 = vpop.f32.mrb[0].mxu0
      %772 = vdwg.mxu0
      %v773 = vlaneseq
      %v774 = vshrl.u32 %v773, 7
      %v775 = vsub.s32 1, %v774
      %v776 = vrot.slane %v375, %v775
      %v777 = vadd.f32 %v768, %v776
      %v778 = vadd.f32 %v374, %v777
      %v779 = vsel %vm348, %v778, 0.0
      %780 = vadd.xlane.f32.xlu0 %v779
      %v781 = vpop.xlane.xlu0 %780
      %v782 = vmul.f32 %v781, %v352
      %v783 = vmul.f32 %v778, %v778
      %v784 = vsel %vm348, %v783, 0.0
      %785 = vadd.xlane.f32.xlu0 %v784
      %v786 = vpop.xlane.xlu0 %785
      %v787 = vmul.f32 %v786, %v352
      %v788 = vmul.f32 %v782, %v782
      %v789 = vsub.f32 %v787, %v788
      %v790 = vsub.f32 %v778, %v782
      %v791 = vadd.f32 %v789, 1e-12
      %v792 = vrsqrt.pop %v791
      %v793 = vmul.f32 %v790, %v792
      %v794 = vlaneseq
      %v795 = vshrl.u32 %v794, 7
      %v796 = vsub.s32 2, %v795
      %v797 = vrot.slane %v375, %v796
      %v798 = vmul.f32 %v793, %v797
      %v799 = vlaneseq
      %v800 = vshrl.u32 %v799, 7
      %v801 = vsub.s32 3, %v800
      %v802 = vrot.slane %v375, %v801
      %v803 = vadd.f32 %v798, %v802
      %v804 = vpack.c.bf16 %v803, %v803
      %v805 = vld [vmem:[%s4] sm:$0xf]
      %v806 = vld [vmem:[%s4 + $0x4] sm:$0xf]
      %v807 = vld [vmem:[%s4 + $0x8] sm:$0xf]
      %v808 = vld [vmem:[%s4 + $0xc] sm:$0xf]
      %v809 = vlaneseq
      %v810 = vshrl.u32 %v809, 7
      %v811 = vsub.s32 4, %v810
      %v812 = vrot.slane %v375, %v811
      %v817 = vunpack.c.l.b16 %v805
      %v818 = vunpack.c.l.b16 %v806
      %v819 = vunpack.c.l.b16 %v807
      %v820 = vunpack.c.l.b16 %v808
      %v821 = vpack.c.b16 %v818, %v817
      %v822 = vpack.c.b16 %v820, %v819
      %v826 = vsel %vm348, %v804, 0
      %828 = vmatprep.subr.bf16.mxu0 0
      %829 = vmatpush1.bf16.msra.mxu0 %v821
      %830 = vmatprep.subr.bf16.mxu0 0
      %831 = vmatpush1.bf16.msra.mxu0 %v822
      %832 = vmatprep.subr.bf16.mxu0 0
      %833 = vmatpush1.bf16.msra.mxu0 0
      %834 = vmatprep.subr.bf16.mxu0 0
      %835 = vmatpush1.bf16.msra.mxu0 0
      %836 = vmatprep.subr.bf16.mxu0 0
      %837 = vmatpush1.bf16.msra.mxu0 0
      %838 = vmatprep.subr.bf16.mxu0 0
      %839 = vmatpush1.bf16.msra.mxu0 0
      %840 = vmatprep.subr.bf16.mxu0 0
      %841 = vmatpush1.bf16.msra.mxu0 0
      %842 = vmatprep.subr.bf16.mxu0 0
      %843 = vmatpush1.bf16.msra.mxu0 0
      %844 = vmatprep.subr.bf16.mxu0 0
      %845 = vmatpush1.bf16.msra.mxu0 0
      %846 = vmatprep.subr.bf16.mxu0 0
      %847 = vmatpush1.bf16.msra.mxu0 0
      %848 = vmatprep.subr.bf16.mxu0 0
      %849 = vmatpush1.bf16.msra.mxu0 0
      %850 = vmatprep.subr.bf16.mxu0 0
      %851 = vmatpush1.bf16.msra.mxu0 0
      %852 = vmatprep.subr.bf16.mxu0 0
      %853 = vmatpush1.bf16.msra.mxu0 0
      %854 = vmatprep.subr.bf16.mxu0 0
      %855 = vmatpush1.bf16.msra.mxu0 0
      %856 = vmatprep.subr.bf16.mxu0 0
      %857 = vmatpush1.bf16.msra.mxu0 0
      %858 = vmatprep.subr.bf16.mxu0 0
      %859 = vmatpush1.bf16.msra.mxu0 0
      %860 = vmatprep.mubr.bf16.mxu0 0
      %861 = vmatmul.mubr.bf16.gmra.mrb[0].mxu0 %v826
      %v862 = vpop.f32.mrb[0].mxu0
      %v863 = vadd.f32 %v812, %v862
      %v864 = vpop.f32.mrb[0].mxu0
      %v865 = vpop.f32.mrb[0].mxu0
      %v866 = vpop.f32.mrb[0].mxu0
      %867 = vdwg.mxu0
      %v868 = vmul.f32 %v863, %v863
      %v869 = vmul.f32 %v863, %v868
      %v870 = vmul.f32 %v869, 0.044715
      %v871 = vadd.f32 %v863, %v870
      %v872 = vmul.f32 %v871, 0.7978846
      %v873 = vtanh.pop %v872
      %v874 = vadd.f32 %v873, 1.0
      %v875 = vmul.f32 %v874, 0.5
      %v876 = vmul.f32 %v863, %v875
      %v877 = vpack.c.bf16 %v876, %v876
      %v878 = vld [vmem:[%s5] sm:$0xf]
      %v879 = vld [vmem:[%s5 + $0x4] sm:$0xf]
      %v880 = vld [vmem:[%s5 + $0x8] sm:$0xf]
      %v881 = vld [vmem:[%s5 + $0xc] sm:$0xf]
      %v882 = vld [vmem:[%s5 + $0x10] sm:$0xf]
      %v883 = vld [vmem:[%s5 + $0x14] sm:$0xf]
      %v884 = vld [vmem:[%s5 + $0x18] sm:$0xf]
      %v885 = vld [vmem:[%s5 + $0x1c] sm:$0xf]
      %v886 = vlaneseq
      %v887 = vshrl.u32 %v886, 7
      %v888 = vsub.s32 5, %v887
      %v889 = vrot.slane %v375, %v888
      %v898 = vunpack.c.l.b16 %v878
      %v899 = vunpack.c.l.b16 %v879
      %v900 = vunpack.c.l.b16 %v880
      %v901 = vunpack.c.l.b16 %v881
      %v902 = vunpack.c.l.b16 %v882
      %v903 = vunpack.c.l.b16 %v883
      %v904 = vunpack.c.l.b16 %v884
      %v905 = vunpack.c.l.b16 %v885
      %v906 = vpack.c.b16 %v899, %v898
      %v907 = vpack.c.b16 %v901, %v900
      %v908 = vpack.c.b16 %v903, %v902
      %v909 = vpack.c.b16 %v905, %v904
      %vm914 = vcmask 523264
      %v916 = vsel %vm914, %v877, 0
      %918 = vmatprep.subr.bf16.mxu0 0
      %919 = vmatpush1.bf16.msra.mxu0 %v906
      %920 = vmatprep.subr.bf16.mxu0 0
      %921 = vmatpush1.bf16.msra.mxu0 %v907
      %922 = vmatprep.subr.bf16.mxu0 0
      %923 = vmatpush1.bf16.msra.mxu0 %v908
      %924 = vmatprep.subr.bf16.mxu0 0
      %925 = vmatpush1.bf16.msra.mxu0 %v909
      %926 = vmatprep.subr.bf16.mxu0 0
      %927 = vmatpush1.bf16.msra.mxu0 0
      %928 = vmatprep.subr.bf16.mxu0 0
      %929 = vmatpush1.bf16.msra.mxu0 0
      %930 = vmatprep.subr.bf16.mxu0 0
      %931 = vmatpush1.bf16.msra.mxu0 0
      %932 = vmatprep.subr.bf16.mxu0 0
      %933 = vmatpush1.bf16.msra.mxu0 0
      %934 = vmatprep.subr.bf16.mxu0 0
      %935 = vmatpush1.bf16.msra.mxu0 0
      %936 = vmatprep.subr.bf16.mxu0 0
      %937 = vmatpush1.bf16.msra.mxu0 0
      %938 = vmatprep.subr.bf16.mxu0 0
      %939 = vmatpush1.bf16.msra.mxu0 0
      %940 = vmatprep.subr.bf16.mxu0 0
      %941 = vmatpush1.bf16.msra.mxu0 0
      %942 = vmatprep.subr.bf16.mxu0 0
      %943 = vmatpush1.bf16.msra.mxu0 0
      %944 = vmatprep.subr.bf16.mxu0 0
      %945 = vmatpush1.bf16.msra.mxu0 0
      %946 = vmatprep.subr.bf16.mxu0 0
      %947 = vmatpush1.bf16.msra.mxu0 0
      %948 = vmatprep.subr.bf16.mxu0 0
      %949 = vmatpush1.bf16.msra.mxu0 0
      %950 = vmatprep.mubr.bf16.mxu0 0
      %951 = vmatmul.mubr.bf16.gmra.mrb[0].mxu0 %v916
      %v952 = vpop.f32.mrb[0].mxu0
      %v953 = vadd.f32 %v889, %v952
      %v954 = vpop.f32.mrb[0].mxu0
      %v955 = vpop.f32.mrb[0].mxu0
      %v956 = vpop.f32.mrb[0].mxu0
      %957 = vdwg.mxu0
      %v958 = vadd.f32 %v803, %v953
      %v959 = vsel %vm348, %v958, 0.0
      %960 = vadd.xlane.f32.xlu0 %v959
      %v961 = vpop.xlane.xlu0 %960
      %v962 = vmul.f32 %v961, %v352
      %v963 = vmul.f32 %v958, %v958
      %v964 = vsel %vm348, %v963, 0.0
      %965 = vadd.xlane.f32.xlu0 %v964
      %v966 = vpop.xlane.xlu0 %965
      %v967 = vmul.f32 %v966, %v352
      %v968 = vmul.f32 %v962, %v962
      %v969 = vsub.f32 %v967, %v968
      %v970 = vsub.f32 %v958, %v962
      %v971 = vadd.f32 %v969, 1e-12
      %v972 = vrsqrt.pop %v971
      %v973 = vmul.f32 %v970, %v972
      %v974 = vlaneseq
      %v975 = vshrl.u32 %v974, 7
      %v976 = vsub.s32 6, %v975
      %v977 = vrot.slane %v375, %v976
      %v978 = vmul.f32 %v973, %v977
      %v979 = vlaneseq
      %v980 = vshrl.u32 %v979, 7
      %v981 = vsub.s32 7, %v980
      %v982 = vrot.slane %v375, %v981
      %v983 = vadd.f32 %v978, %v982
      %s984 = scalar_lea.vmem %s6, 8
      %v985 = vld [vmem:[%s984] sm:$0xff]
      %v986 = vpack.c.bf16 %v983, %v983
      %s987 = scalar_lea.vmem %s2, 16
      %v988 = vld [vmem:[%s987] sm:$0xf]
      %v989 = vld [vmem:[%s987 + $0x4] sm:$0xf]
      %v990 = vld [vmem:[%s987 + $0x8] sm:$0xf]
      %v991 = vld [vmem:[%s987 + $0xc] sm:$0xf]
      %v992 = vlaneseq
      %v993 = vshrl.u32 %v992, 7
      %v994 = vsub.s32 0, %v993
      %v995 = vrot.slane %v985, %v994
      %v1000 = vunpack.c.l.b16 %v988
      %v1001 = vunpack.c.l.b16 %v989
      %v1002 = vunpack.c.l.b16 %v990
      %v1003 = vunpack.c.l.b16 %v991
      %v1004 = vpack.c.b16 %v1001, %v1000
      %v1005 = vpack.c.b16 %v1003, %v1002
      %v1009 = vsel %vm348, %v986, 0
      %1011 = vmatprep.subr.bf16.mxu0 0
      %1012 = vmatpush1.bf16.msra.mxu0 %v1004
      %1013 = vmatprep.subr.bf16.mxu0 0
      %1014 = vmatpush1.bf16.msra.mxu0 %v1005
      %1015 = vmatprep.subr.bf16.mxu0 0
      %1016 = vmatpush1.bf16.msra.mxu0 0
      %1017 = vmatprep.subr.bf16.mxu0 0
      %1018 = vmatpush1.bf16.msra.mxu0 0
      %1019 = vmatprep.subr.bf16.mxu0 0
      %1020 = vmatpush1.bf16.msra.mxu0 0
      %1021 = vmatprep.subr.bf16.mxu0 0
      %1022 = vmatpush1.bf16.msra.mxu0 0
      %1023 = vmatprep.subr.bf16.mxu0 0
      %1024 = vmatpush1.bf16.msra.mxu0 0
      %1025 = vmatprep.subr.bf16.mxu0 0
      %1026 = vmatpush1.bf16.msra.mxu0 0
      %1027 = vmatprep.subr.bf16.mxu0 0
      %1028 = vmatpush1.bf16.msra.mxu0 0
      %1029 = vmatprep.subr.bf16.mxu0 0
      %1030 = vmatpush1.bf16.msra.mxu0 0
      %1031 = vmatprep.subr.bf16.mxu0 0
      %1032 = vmatpush1.bf16.msra.mxu0 0
      %1033 = vmatprep.subr.bf16.mxu0 0
      %1034 = vmatpush1.bf16.msra.mxu0 0
      %1035 = vmatprep.subr.bf16.mxu0 0
      %1036 = vmatpush1.bf16.msra.mxu0 0
      %1037 = vmatprep.subr.bf16.mxu0 0
      %1038 = vmatpush1.bf16.msra.mxu0 0
      %1039 = vmatprep.subr.bf16.mxu0 0
      %1040 = vmatpush1.bf16.msra.mxu0 0
      %1041 = vmatprep.subr.bf16.mxu0 0
      %1042 = vmatpush1.bf16.msra.mxu0 0
      %1043 = vmatprep.mubr.bf16.mxu0 0
      %1044 = vmatmul.mubr.bf16.gmra.mrb[0].mxu0 %v1009
      %v1045 = vpop.f32.mrb[0].mxu0
      %v1046 = vadd.f32 %v995, %v1045
      %v1047 = vpop.f32.mrb[0].mxu0
      %v1048 = vpop.f32.mrb[0].mxu0
      %v1049 = vpop.f32.mrb[0].mxu0
      %1050 = vdwg.mxu0
      %v1051 = vpack.c.bf16 %v1046, %v1046
      %1053 = vrot.lane.b32.xlu0 %v1051, 96
      %v1054 = vpop.permute.xlu0 %1053
      %v1056 = vsel %vm450, %v1051, 0
      %v1059 = vsel %vm450, %v1054, 0
      %1061 = vmatprep.subr.bf16.mxu0 0
      %1062 = vmatpush1.bf16.xpose.msra.mxu0 %v1059
      %1063 = vmatprep.subr.bf16.mxu0 0
      %1064 = vmatpush1.bf16.xpose.msra.mxu0 0
      %1065 = vmatprep.subr.bf16.mxu0 0
      %1066 = vmatpush1.bf16.xpose.msra.mxu0 0
      %1067 = vmatprep.subr.bf16.mxu0 0
      %1068 = vmatpush1.bf16.xpose.msra.mxu0 0
      %1069 = vmatprep.subr.bf16.mxu0 0
      %1070 = vmatpush1.bf16.xpose.msra.mxu0 0
      %1071 = vmatprep.subr.bf16.mxu0 0
      %1072 = vmatpush1.bf16.xpose.msra.mxu0 0
      %1073 = vmatprep.subr.bf16.mxu0 0
      %1074 = vmatpush1.bf16.xpose.msra.mxu0 0
      %1075 = vmatprep.subr.bf16.mxu0 0
      %1076 = vmatpush1.bf16.xpose.msra.mxu0 0
      %1077 = vmatprep.subr.bf16.mxu0 0
      %1078 = vmatpush1.bf16.xpose.msra.mxu0 0
      %1079 = vmatprep.subr.bf16.mxu0 0
      %1080 = vmatpush1.bf16.xpose.msra.mxu0 0
      %1081 = vmatprep.subr.bf16.mxu0 0
      %1082 = vmatpush1.bf16.xpose.msra.mxu0 0
      %1083 = vmatprep.subr.bf16.mxu0 0
      %1084 = vmatpush1.bf16.xpose.msra.mxu0 0
      %1085 = vmatprep.subr.bf16.mxu0 0
      %1086 = vmatpush1.bf16.xpose.msra.mxu0 0
      %1087 = vmatprep.subr.bf16.mxu0 0
      %1088 = vmatpush1.bf16.xpose.msra.mxu0 0
      %1089 = vmatprep.subr.bf16.mxu0 0
      %1090 = vmatpush1.bf16.xpose.msra.mxu0 0
      %1091 = vmatprep.subr.bf16.mxu0 0
      %1092 = vmatpush1.bf16.xpose.msra.mxu0 0
      %1093 = vmatprep.mubr.bf16.mxu0 0
      %1094 = vmatmul.mubr.bf16.gmra.mrb[0].mxu0 %v1056
      %v1095 = vpop.f32.mrb[0].mxu0
      %v1096 = vadd.f32 %v445, %v1095
      %v1097 = vpop.f32.mrb[0].mxu0
      %v1098 = vpop.f32.mrb[0].mxu0
      %v1099 = vpop.f32.mrb[0].mxu0
      %1100 = vdwg.mxu0
      %v1101 = vsel %vm497, %v1096, -inf
      %1102 = vmax.xlane.f32.xlu0 %v1101
      %v1103 = vpop.xlane.xlu0 %1102
      %v1104 = vsub.f32 %v1096, %v1103
      %v1105 = vmul.f32 %v1104, 1.442695
      %v1106 = vpow.pop %v1105
      %v1107 = vsel %vm497, %v1106, 0.0
      %1108 = vadd.xlane.f32.xlu0 %v1107
      %v1109 = vpop.xlane.xlu0 %1108
      %v1110 = vrcp.pop %v1109
      %v1111 = vmul.f32 %v1106, %v1110
      %v1112 = vpack.c.bf16 %v1111, %v1111
      %1113 = vrot.lane.b32.xlu0 %v1051, 64
      %v1114 = vpop.permute.xlu0 %1113
      %v1116 = vsel %vm497, %v1112, 0
      %v1119 = vsel %vm515, %v1114, 0
      %1121 = vmatprep.subr.bf16.mxu0 0
      %1122 = vmatpush1.bf16.msra.mxu0 %v1119
      %1123 = vmatprep.subr.bf16.mxu0 0
      %1124 = vmatpush1.bf16.msra.mxu0 0
      %1125 = vmatprep.subr.bf16.mxu0 0
      %1126 = vmatpush1.bf16.msra.mxu0 0
      %1127 = vmatprep.subr.bf16.mxu0 0
      %1128 = vmatpush1.bf16.msra.mxu0 0
      %1129 = vmatprep.subr.bf16.mxu0 0
      %1130 = vmatpush1.bf16.msra.mxu0 0
      %1131 = vmatprep.subr.bf16.mxu0 0
      %1132 = vmatpush1.bf16.msra.mxu0 0
      %1133 = vmatprep.subr.bf16.mxu0 0
      %1134 = vmatpush1.bf16.msra.mxu0 0
      %1135 = vmatprep.subr.bf16.mxu0 0
      %1136 = vmatpush1.bf16.msra.mxu0 0
      %1137 = vmatprep.subr.bf16.mxu0 0
      %1138 = vmatpush1.bf16.msra.mxu0 0
      %1139 = vmatprep.subr.bf16.mxu0 0
      %1140 = vmatpush1.bf16.msra.mxu0 0
      %1141 = vmatprep.subr.bf16.mxu0 0
      %1142 = vmatpush1.bf16.msra.mxu0 0
      %1143 = vmatprep.subr.bf16.mxu0 0
      %1144 = vmatpush1.bf16.msra.mxu0 0
      %1145 = vmatprep.subr.bf16.mxu0 0
      %1146 = vmatpush1.bf16.msra.mxu0 0
      %1147 = vmatprep.subr.bf16.mxu0 0
      %1148 = vmatpush1.bf16.msra.mxu0 0
      %1149 = vmatprep.subr.bf16.mxu0 0
      %1150 = vmatpush1.bf16.msra.mxu0 0
      %1151 = vmatprep.subr.bf16.mxu0 0
      %1152 = vmatpush1.bf16.msra.mxu0 0
      %1153 = vmatprep.mubr.bf16.mxu0 0
      %1154 = vmatmul.mubr.bf16.gmra.mrb[0].mxu0 %v1116
      %v1155 = vpop.f32.mrb[0].mxu0
      %v1156 = vadd.f32 0.0, %v1155
      %v1157 = vpop.f32.mrb[0].mxu0
      %v1158 = vpop.f32.mrb[0].mxu0
      %v1159 = vpop.f32.mrb[0].mxu0
      %1160 = vdwg.mxu0
      %v1161 = vpack.c.bf16 %v1156, %v1156
      %s1162 = scalar_lea.vmem %s3, 16
      %v1163 = vld [vmem:[%s1162] sm:$0xf]
      %v1164 = vld [vmem:[%s1162 + $0x4] sm:$0xf]
      %1165 = vrot.lane.b32.xlu0 %v1051, 112
      %v1166 = vpop.permute.xlu0 %1165
      %1167 = vrot.lane.b32.xlu0 %v1051, 80
      %v1168 = vpop.permute.xlu0 %1167
      %v1170 = vsel %vm450, %v1166, 0
      %v1173 = vsel %vm450, %v1168, 0
      %1175 = vmatprep.subr.bf16.mxu0 0
      %1176 = vmatpush1.bf16.xpose.msra.mxu0 %v1173
      %1177 = vmatprep.subr.bf16.mxu0 0
      %1178 = vmatpush1.bf16.xpose.msra.mxu0 0
      %1179 = vmatprep.subr.bf16.mxu0 0
      %1180 = vmatpush1.bf16.xpose.msra.mxu0 0
      %1181 = vmatprep.subr.bf16.mxu0 0
      %1182 = vmatpush1.bf16.xpose.msra.mxu0 0
      %1183 = vmatprep.subr.bf16.mxu0 0
      %1184 = vmatpush1.bf16.xpose.msra.mxu0 0
      %1185 = vmatprep.subr.bf16.mxu0 0
      %1186 = vmatpush1.bf16.xpose.msra.mxu0 0
      %1187 = vmatprep.subr.bf16.mxu0 0
      %1188 = vmatpush1.bf16.xpose.msra.mxu0 0
      %1189 = vmatprep.subr.bf16.mxu0 0
      %1190 = vmatpush1.bf16.xpose.msra.mxu0 0
      %1191 = vmatprep.subr.bf16.mxu0 0
      %1192 = vmatpush1.bf16.xpose.msra.mxu0 0
      %1193 = vmatprep.subr.bf16.mxu0 0
      %1194 = vmatpush1.bf16.xpose.msra.mxu0 0
      %1195 = vmatprep.subr.bf16.mxu0 0
      %1196 = vmatpush1.bf16.xpose.msra.mxu0 0
      %1197 = vmatprep.subr.bf16.mxu0 0
      %1198 = vmatpush1.bf16.xpose.msra.mxu0 0
      %1199 = vmatprep.subr.bf16.mxu0 0
      %1200 = vmatpush1.bf16.xpose.msra.mxu0 0
      %1201 = vmatprep.subr.bf16.mxu0 0
      %1202 = vmatpush1.bf16.xpose.msra.mxu0 0
      %1203 = vmatprep.subr.bf16.mxu0 0
      %1204 = vmatpush1.bf16.xpose.msra.mxu0 0
      %1205 = vmatprep.subr.bf16.mxu0 0
      %1206 = vmatpush1.bf16.xpose.msra.mxu0 0
      %1207 = vmatprep.mubr.bf16.mxu0 0
      %1208 = vmatmul.mubr.bf16.gmra.mrb[0].mxu0 %v1170
      %v1209 = vpop.f32.mrb[0].mxu0
      %v1210 = vadd.f32 %v445, %v1209
      %v1211 = vpop.f32.mrb[0].mxu0
      %v1212 = vpop.f32.mrb[0].mxu0
      %v1213 = vpop.f32.mrb[0].mxu0
      %1214 = vdwg.mxu0
      %v1215 = vsel %vm497, %v1210, -inf
      %1216 = vmax.xlane.f32.xlu0 %v1215
      %v1217 = vpop.xlane.xlu0 %1216
      %v1218 = vsub.f32 %v1210, %v1217
      %v1219 = vmul.f32 %v1218, 1.442695
      %v1220 = vpow.pop %v1219
      %v1221 = vsel %vm497, %v1220, 0.0
      %1222 = vadd.xlane.f32.xlu0 %v1221
      %v1223 = vpop.xlane.xlu0 %1222
      %v1224 = vrcp.pop %v1223
      %v1225 = vmul.f32 %v1220, %v1224
      %v1226 = vpack.c.bf16 %v1225, %v1225
      %1227 = vrot.lane.b32.xlu0 %v1051, 48
      %v1228 = vpop.permute.xlu0 %1227
      %v1230 = vsel %vm497, %v1226, 0
      %v1233 = vsel %vm515, %v1228, 0
      %1235 = vmatprep.subr.bf16.mxu0 0
      %1236 = vmatpush1.bf16.msra.mxu0 %v1233
      %1237 = vmatprep.subr.bf16.mxu0 0
      %1238 = vmatpush1.bf16.msra.mxu0 0
      %1239 = vmatprep.subr.bf16.mxu0 0
      %1240 = vmatpush1.bf16.msra.mxu0 0
      %1241 = vmatprep.subr.bf16.mxu0 0
      %1242 = vmatpush1.bf16.msra.mxu0 0
      %1243 = vmatprep.subr.bf16.mxu0 0
      %1244 = vmatpush1.bf16.msra.mxu0 0
      %1245 = vmatprep.subr.bf16.mxu0 0
      %1246 = vmatpush1.bf16.msra.mxu0 0
      %1247 = vmatprep.subr.bf16.mxu0 0
      %1248 = vmatpush1.bf16.msra.mxu0 0
      %1249 = vmatprep.subr.bf16.mxu0 0
      %1250 = vmatpush1.bf16.msra.mxu0 0
      %1251 = vmatprep.subr.bf16.mxu0 0
      %1252 = vmatpush1.bf16.msra.mxu0 0
      %1253 = vmatprep.subr.bf16.mxu0 0
      %1254 = vmatpush1.bf16.msra.mxu0 0
      %1255 = vmatprep.subr.bf16.mxu0 0
      %1256 = vmatpush1.bf16.msra.mxu0 0
      %1257 = vmatprep.subr.bf16.mxu0 0
      %1258 = vmatpush1.bf16.msra.mxu0 0
      %1259 = vmatprep.subr.bf16.mxu0 0
      %1260 = vmatpush1.bf16.msra.mxu0 0
      %1261 = vmatprep.subr.bf16.mxu0 0
      %1262 = vmatpush1.bf16.msra.mxu0 0
      %1263 = vmatprep.subr.bf16.mxu0 0
      %1264 = vmatpush1.bf16.msra.mxu0 0
      %1265 = vmatprep.subr.bf16.mxu0 0
      %1266 = vmatpush1.bf16.msra.mxu0 0
      %1267 = vmatprep.mubr.bf16.mxu0 0
      %1268 = vmatmul.mubr.bf16.gmra.mrb[0].mxu0 %v1230
      %v1269 = vpop.f32.mrb[0].mxu0
      %v1270 = vadd.f32 0.0, %v1269
      %v1271 = vpop.f32.mrb[0].mxu0
      %v1272 = vpop.f32.mrb[0].mxu0
      %v1273 = vpop.f32.mrb[0].mxu0
      %1274 = vdwg.mxu0
      %v1275 = vpack.c.bf16 %v1270, %v1270
      %v1276 = vld [vmem:[%s1162 + $0x8] sm:$0xf]
      %v1277 = vld [vmem:[%s1162 + $0xc] sm:$0xf]
      %v1280 = vunpack.c.l.b16 %v1276
      %v1281 = vunpack.c.l.b16 %v1277
      %v1282 = vpack.c.b16 %v1281, %v1280
      %v1285 = vsel %vm450, %v1275, 0
      %1287 = vmatprep.subr.bf16.mxu0 0
      %1288 = vmatpush1.bf16.msra.mxu0 %v1282
      %1289 = vmatprep.subr.bf16.mxu0 0
      %1290 = vmatpush1.bf16.msra.mxu0 0
      %1291 = vmatprep.subr.bf16.mxu0 0
      %1292 = vmatpush1.bf16.msra.mxu0 0
      %1293 = vmatprep.subr.bf16.mxu0 0
      %1294 = vmatpush1.bf16.msra.mxu0 0
      %1295 = vmatprep.subr.bf16.mxu0 0
      %1296 = vmatpush1.bf16.msra.mxu0 0
      %1297 = vmatprep.subr.bf16.mxu0 0
      %1298 = vmatpush1.bf16.msra.mxu0 0
      %1299 = vmatprep.subr.bf16.mxu0 0
      %1300 = vmatpush1.bf16.msra.mxu0 0
      %1301 = vmatprep.subr.bf16.mxu0 0
      %1302 = vmatpush1.bf16.msra.mxu0 0
      %1303 = vmatprep.subr.bf16.mxu0 0
      %1304 = vmatpush1.bf16.msra.mxu0 0
      %1305 = vmatprep.subr.bf16.mxu0 0
      %1306 = vmatpush1.bf16.msra.mxu0 0
      %1307 = vmatprep.subr.bf16.mxu0 0
      %1308 = vmatpush1.bf16.msra.mxu0 0
      %1309 = vmatprep.subr.bf16.mxu0 0
      %1310 = vmatpush1.bf16.msra.mxu0 0
      %1311 = vmatprep.subr.bf16.mxu0 0
      %1312 = vmatpush1.bf16.msra.mxu0 0
      %1313 = vmatprep.subr.bf16.mxu0 0
      %1314 = vmatpush1.bf16.msra.mxu0 0
      %1315 = vmatprep.subr.bf16.mxu0 0
      %1316 = vmatpush1.bf16.msra.mxu0 0
      %1317 = vmatprep.subr.bf16.mxu0 0
      %1318 = vmatpush1.bf16.msra.mxu0 0
      %1319 = vmatprep.mubr.bf16.mxu0 0
      %1320 = vmatmul.mubr.bf16.gmra.mrb[0].mxu0 %v1285
      %v1321 = vpop.f32.mrb[0].mxu0
      %v1322 = vadd.f32 0.0, %v1321
      %v1323 = vpop.f32.mrb[0].mxu0
      %v1324 = vpop.f32.mrb[0].mxu0
      %v1325 = vpop.f32.mrb[0].mxu0
      %1326 = vdwg.mxu0
      %v1329 = vunpack.c.l.b16 %v1163
      %v1330 = vunpack.c.l.b16 %v1164
      %v1331 = vpack.c.b16 %v1330, %v1329
      %v1334 = vsel %vm450, %v1161, 0
      %1336 = vmatprep.subr.bf16.mxu0 0
      %1337 = vmatpush1.bf16.msra.mxu0 %v1331
      %1338 = vmatprep.subr.bf16.mxu0 0
      %1339 = vmatpush1.bf16.msra.mxu0 0
      %1340 = vmatprep.subr.bf16.mxu0 0
      %1341 = vmatpush1.bf16.msra.mxu0 0
      %1342 = vmatprep.subr.bf16.mxu0 0
      %1343 = vmatpush1.bf16.msra.mxu0 0
      %1344 = vmatprep.subr.bf16.mxu0 0
      %1345 = vmatpush1.bf16.msra.mxu0 0
      %1346 = vmatprep.subr.bf16.mxu0 0
      %1347 = vmatpush1.bf16.msra.mxu0 0
      %1348 = vmatprep.subr.bf16.mxu0 0
      %1349 = vmatpush1.bf16.msra.mxu0 0
      %1350 = vmatprep.subr.bf16.mxu0 0
      %1351 = vmatpush1.bf16.msra.mxu0 0
      %1352 = vmatprep.subr.bf16.mxu0 0
      %1353 = vmatpush1.bf16.msra.mxu0 0
      %1354 = vmatprep.subr.bf16.mxu0 0
      %1355 = vmatpush1.bf16.msra.mxu0 0
      %1356 = vmatprep.subr.bf16.mxu0 0
      %1357 = vmatpush1.bf16.msra.mxu0 0
      %1358 = vmatprep.subr.bf16.mxu0 0
      %1359 = vmatpush1.bf16.msra.mxu0 0
      %1360 = vmatprep.subr.bf16.mxu0 0
      %1361 = vmatpush1.bf16.msra.mxu0 0
      %1362 = vmatprep.subr.bf16.mxu0 0
      %1363 = vmatpush1.bf16.msra.mxu0 0
      %1364 = vmatprep.subr.bf16.mxu0 0
      %1365 = vmatpush1.bf16.msra.mxu0 0
      %1366 = vmatprep.subr.bf16.mxu0 0
      %1367 = vmatpush1.bf16.msra.mxu0 0
      %1368 = vmatprep.mubr.bf16.mxu0 0
      %1369 = vmatmul.mubr.bf16.gmra.mrb[0].mxu0 %v1334
      %v1370 = vpop.f32.mrb[0].mxu0
      %v1371 = vadd.f32 %v1322, %v1370
      %v1372 = vpop.f32.mrb[0].mxu0
      %v1373 = vpop.f32.mrb[0].mxu0
      %v1374 = vpop.f32.mrb[0].mxu0
      %1375 = vdwg.mxu0
      %v1376 = vlaneseq
      %v1377 = vshrl.u32 %v1376, 7
      %v1378 = vsub.s32 1, %v1377
      %v1379 = vrot.slane %v985, %v1378
      %v1380 = vadd.f32 %v1371, %v1379
      %v1381 = vadd.f32 %v983, %v1380
      %v1382 = vsel %vm348, %v1381, 0.0
      %1383 = vadd.xlane.f32.xlu0 %v1382
      %v1384 = vpop.xlane.xlu0 %1383
      %v1385 = vmul.f32 %v1384, %v352
      %v1386 = vmul.f32 %v1381, %v1381
      %v1387 = vsel %vm348, %v1386, 0.0
      %1388 = vadd.xlane.f32.xlu0 %v1387
      %v1389 = vpop.xlane.xlu0 %1388
      %v1390 = vmul.f32 %v1389, %v352
      %v1391 = vmul.f32 %v1385, %v1385
      %v1392 = vsub.f32 %v1390, %v1391
      %v1393 = vsub.f32 %v1381, %v1385
      %v1394 = vadd.f32 %v1392, 1e-12
      %v1395 = vrsqrt.pop %v1394
      %v1396 = vmul.f32 %v1393, %v1395
      %v1397 = vlaneseq
      %v1398 = vshrl.u32 %v1397, 7
      %v1399 = vsub.s32 2, %v1398
      %v1400 = vrot.slane %v985, %v1399
      %v1401 = vmul.f32 %v1396, %v1400
      %v1402 = vlaneseq
      %v1403 = vshrl.u32 %v1402, 7
      %v1404 = vsub.s32 3, %v1403
      %v1405 = vrot.slane %v985, %v1404
      %v1406 = vadd.f32 %v1401, %v1405
      %v1407 = vpack.c.bf16 %v1406, %v1406
      %s1408 = scalar_lea.vmem %s4, 16
      %v1409 = vld [vmem:[%s1408] sm:$0xf]
      %v1410 = vld [vmem:[%s1408 + $0x4] sm:$0xf]
      %v1411 = vld [vmem:[%s1408 + $0x8] sm:$0xf]
      %v1412 = vld [vmem:[%s1408 + $0xc] sm:$0xf]
      %v1413 = vlaneseq
      %v1414 = vshrl.u32 %v1413, 7
      %v1415 = vsub.s32 4, %v1414
      %v1416 = vrot.slane %v985, %v1415
      %v1421 = vunpack.c.l.b16 %v1409
      %v1422 = vunpack.c.l.b16 %v1410
      %v1423 = vunpack.c.l.b16 %v1411
      %v1424 = vunpack.c.l.b16 %v1412
      %v1425 = vpack.c.b16 %v1422, %v1421
      %v1426 = vpack.c.b16 %v1424, %v1423
      %v1430 = vsel %vm348, %v1407, 0
      %1432 = vmatprep.subr.bf16.mxu0 0
      %1433 = vmatpush1.bf16.msra.mxu0 %v1425
      %1434 = vmatprep.subr.bf16.mxu0 0
      %1435 = vmatpush1.bf16.msra.mxu0 %v1426
      %1436 = vmatprep.subr.bf16.mxu0 0
      %1437 = vmatpush1.bf16.msra.mxu0 0
      %1438 = vmatprep.subr.bf16.mxu0 0
      %1439 = vmatpush1.bf16.msra.mxu0 0
      %1440 = vmatprep.subr.bf16.mxu0 0
      %1441 = vmatpush1.bf16.msra.mxu0 0
      %1442 = vmatprep.subr.bf16.mxu0 0
      %1443 = vmatpush1.bf16.msra.mxu0 0
      %1444 = vmatprep.subr.bf16.mxu0 0
      %1445 = vmatpush1.bf16.msra.mxu0 0
      %1446 = vmatprep.subr.bf16.mxu0 0
      %1447 = vmatpush1.bf16.msra.mxu0 0
      %1448 = vmatprep.subr.bf16.mxu0 0
      %1449 = vmatpush1.bf16.msra.mxu0 0
      %1450 = vmatprep.subr.bf16.mxu0 0
      %1451 = vmatpush1.bf16.msra.mxu0 0
      %1452 = vmatprep.subr.bf16.mxu0 0
      %1453 = vmatpush1.bf16.msra.mxu0 0
      %1454 = vmatprep.subr.bf16.mxu0 0
      %1455 = vmatpush1.bf16.msra.mxu0 0
      %1456 = vmatprep.subr.bf16.mxu0 0
      %1457 = vmatpush1.bf16.msra.mxu0 0
      %1458 = vmatprep.subr.bf16.mxu0 0
      %1459 = vmatpush1.bf16.msra.mxu0 0
      %1460 = vmatprep.subr.bf16.mxu0 0
      %1461 = vmatpush1.bf16.msra.mxu0 0
      %1462 = vmatprep.subr.bf16.mxu0 0
      %1463 = vmatpush1.bf16.msra.mxu0 0
      %1464 = vmatprep.mubr.bf16.mxu0 0
      %1465 = vmatmul.mubr.bf16.gmra.mrb[0].mxu0 %v1430
      %v1466 = vpop.f32.mrb[0].mxu0
      %v1467 = vadd.f32 %v1416, %v1466
      %v1468 = vpop.f32.mrb[0].mxu0
      %v1469 = vpop.f32.mrb[0].mxu0
      %v1470 = vpop.f32.mrb[0].mxu0
      %1471 = vdwg.mxu0
      %v1472 = vmul.f32 %v1467, %v1467
      %v1473 = vmul.f32 %v1467, %v1472
      %v1474 = vmul.f32 %v1473, 0.044715
      %v1475 = vadd.f32 %v1467, %v1474
      %v1476 = vmul.f32 %v1475, 0.7978846
      %v1477 = vtanh.pop %v1476
      %v1478 = vadd.f32 %v1477, 1.0
      %v1479 = vmul.f32 %v1478, 0.5
      %v1480 = vmul.f32 %v1467, %v1479
      %v1481 = vpack.c.bf16 %v1480, %v1480
      %s1482 = scalar_lea.vmem %s5, 32
      %v1483 = vld [vmem:[%s1482] sm:$0xf]
      %v1484 = vld [vmem:[%s1482 + $0x4] sm:$0xf]
      %v1485 = vld [vmem:[%s1482 + $0x8] sm:$0xf]
      %v1486 = vld [vmem:[%s1482 + $0xc] sm:$0xf]
      %v1487 = vld [vmem:[%s1482 + $0x10] sm:$0xf]
      %v1488 = vld [vmem:[%s1482 + $0x14] sm:$0xf]
      %v1489 = vld [vmem:[%s1482 + $0x18] sm:$0xf]
      %v1490 = vld [vmem:[%s1482 + $0x1c] sm:$0xf]
      %v1491 = vlaneseq
      %v1492 = vshrl.u32 %v1491, 7
      %v1493 = vsub.s32 5, %v1492
      %v1494 = vrot.slane %v985, %v1493
      %v1503 = vunpack.c.l.b16 %v1483
      %v1504 = vunpack.c.l.b16 %v1484
      %v1505 = vunpack.c.l.b16 %v1485
      %v1506 = vunpack.c.l.b16 %v1486
      %v1507 = vunpack.c.l.b16 %v1487
      %v1508 = vunpack.c.l.b16 %v1488
      %v1509 = vunpack.c.l.b16 %v1489
      %v1510 = vunpack.c.l.b16 %v1490
      %v1511 = vpack.c.b16 %v1504, %v1503
      %v1512 = vpack.c.b16 %v1506, %v1505
      %v1513 = vpack.c.b16 %v1508, %v1507
      %v1514 = vpack.c.b16 %v1510, %v1509
      %v1520 = vsel %vm914, %v1481, 0
      %1522 = vmatprep.subr.bf16.mxu0 0
      %1523 = vmatpush1.bf16.msra.mxu0 %v1511
      %1524 = vmatprep.subr.bf16.mxu0 0
      %1525 = vmatpush1.bf16.msra.mxu0 %v1512
      %1526 = vmatprep.subr.bf16.mxu0 0
      %1527 = vmatpush1.bf16.msra.mxu0 %v1513
      %1528 = vmatprep.subr.bf16.mxu0 0
      %1529 = vmatpush1.bf16.msra.mxu0 %v1514
      %1530 = vmatprep.subr.bf16.mxu0 0
      %1531 = vmatpush1.bf16.msra.mxu0 0
      %1532 = vmatprep.subr.bf16.mxu0 0
      %1533 = vmatpush1.bf16.msra.mxu0 0
      %1534 = vmatprep.subr.bf16.mxu0 0
      %1535 = vmatpush1.bf16.msra.mxu0 0
      %1536 = vmatprep.subr.bf16.mxu0 0
      %1537 = vmatpush1.bf16.msra.mxu0 0
      %1538 = vmatprep.subr.bf16.mxu0 0
      %1539 = vmatpush1.bf16.msra.mxu0 0
      %1540 = vmatprep.subr.bf16.mxu0 0
      %1541 = vmatpush1.bf16.msra.mxu0 0
      %1542 = vmatprep.subr.bf16.mxu0 0
      %1543 = vmatpush1.bf16.msra.mxu0 0
      %1544 = vmatprep.subr.bf16.mxu0 0
      %1545 = vmatpush1.bf16.msra.mxu0 0
      %1546 = vmatprep.subr.bf16.mxu0 0
      %1547 = vmatpush1.bf16.msra.mxu0 0
      %1548 = vmatprep.subr.bf16.mxu0 0
      %1549 = vmatpush1.bf16.msra.mxu0 0
      %1550 = vmatprep.subr.bf16.mxu0 0
      %1551 = vmatpush1.bf16.msra.mxu0 0
      %1552 = vmatprep.subr.bf16.mxu0 0
      %1553 = vmatpush1.bf16.msra.mxu0 0
      %1554 = vmatprep.mubr.bf16.mxu0 0
      %1555 = vmatmul.mubr.bf16.gmra.mrb[0].mxu0 %v1520
      %v1556 = vpop.f32.mrb[0].mxu0
      %v1557 = vadd.f32 %v1494, %v1556
      %v1558 = vpop.f32.mrb[0].mxu0
      %v1559 = vpop.f32.mrb[0].mxu0
      %v1560 = vpop.f32.mrb[0].mxu0
      %1561 = vdwg.mxu0
      %v1562 = vadd.f32 %v1406, %v1557
      %v1563 = vsel %vm348, %v1562, 0.0
      %1564 = vadd.xlane.f32.xlu0 %v1563
      %v1565 = vpop.xlane.xlu0 %1564
      %v1566 = vmul.f32 %v1565, %v352
      %v1567 = vmul.f32 %v1562, %v1562
      %v1568 = vsel %vm348, %v1567, 0.0
      %1569 = vadd.xlane.f32.xlu0 %v1568
      %v1570 = vpop.xlane.xlu0 %1569
      %v1571 = vmul.f32 %v1570, %v352
      %v1572 = vmul.f32 %v1566, %v1566
      %v1573 = vsub.f32 %v1571, %v1572
      %v1574 = vsub.f32 %v1562, %v1566
      %v1575 = vadd.f32 %v1573, 1e-12
      %v1576 = vrsqrt.pop %v1575
      %v1577 = vmul.f32 %v1574, %v1576
      %v1578 = vlaneseq
      %v1579 = vshrl.u32 %v1578, 7
      %v1580 = vsub.s32 6, %v1579
      %v1581 = vrot.slane %v985, %v1580
      %v1582 = vmul.f32 %v1577, %v1581
      %v1583 = vlaneseq
      %v1584 = vshrl.u32 %v1583, 7
      %v1585 = vsub.s32 7, %v1584
      %v1586 = vrot.slane %v985, %v1585
      %v1587 = vadd.f32 %v1582, %v1586
      %v1588 = vpack.c.bf16 %v1587, %v1587
      %v1589 = vld [vmem:[%s7] sm:$0xf]
      %v1590 = vld [vmem:[%s7 + $0x4] sm:$0xf]
      %v1591 = vld [vmem:[%s7 + $0x8] sm:$0xf]
      %v1592 = vld [vmem:[%s7 + $0xc] sm:$0xf]
      %v1593 = vlaneseq
      %v1594 = vshrl.u32 %v1593, 7
      %v1595 = vsub.s32 2, %v1594
      %v1596 = vrot.slane %v344, %v1595
      %v1601 = vunpack.c.l.b16 %v1589
      %v1602 = vunpack.c.l.b16 %v1590
      %v1603 = vunpack.c.l.b16 %v1591
      %v1604 = vunpack.c.l.b16 %v1592
      %v1605 = vpack.c.b16 %v1602, %v1601
      %v1606 = vpack.c.b16 %v1604, %v1603
      %v1610 = vsel %vm348, %v1588, 0
      %1612 = vmatprep.subr.bf16.mxu0 0
      %1613 = vmatpush1.bf16.msra.mxu0 %v1605
      %1614 = vmatprep.subr.bf16.mxu0 0
      %1615 = vmatpush1.bf16.msra.mxu0 %v1606
      %1616 = vmatprep.subr.bf16.mxu0 0
      %1617 = vmatpush1.bf16.msra.mxu0 0
      %1618 = vmatprep.subr.bf16.mxu0 0
      %1619 = vmatpush1.bf16.msra.mxu0 0
      %1620 = vmatprep.subr.bf16.mxu0 0
      %1621 = vmatpush1.bf16.msra.mxu0 0
      %1622 = vmatprep.subr.bf16.mxu0 0
      %1623 = vmatpush1.bf16.msra.mxu0 0
      %1624 = vmatprep.subr.bf16.mxu0 0
      %1625 = vmatpush1.bf16.msra.mxu0 0
      %1626 = vmatprep.subr.bf16.mxu0 0
      %1627 = vmatpush1.bf16.msra.mxu0 0
      %1628 = vmatprep.subr.bf16.mxu0 0
      %1629 = vmatpush1.bf16.msra.mxu0 0
      %1630 = vmatprep.subr.bf16.mxu0 0
      %1631 = vmatpush1.bf16.msra.mxu0 0
      %1632 = vmatprep.subr.bf16.mxu0 0
      %1633 = vmatpush1.bf16.msra.mxu0 0
      %1634 = vmatprep.subr.bf16.mxu0 0
      %1635 = vmatpush1.bf16.msra.mxu0 0
      %1636 = vmatprep.subr.bf16.mxu0 0
      %1637 = vmatpush1.bf16.msra.mxu0 0
      %1638 = vmatprep.subr.bf16.mxu0 0
      %1639 = vmatpush1.bf16.msra.mxu0 0
      %1640 = vmatprep.subr.bf16.mxu0 0
      %1641 = vmatpush1.bf16.msra.mxu0 0
      %1642 = vmatprep.subr.bf16.mxu0 0
      %1643 = vmatpush1.bf16.msra.mxu0 0
      %1644 = vmatprep.mubr.bf16.mxu0 0
      %1645 = vmatmul.mubr.bf16.gmra.mrb[0].mxu0 %v1610
      %v1646 = vpop.f32.mrb[0].mxu0
      %v1647 = vadd.f32 %v1596, %v1646
      %v1648 = vpop.f32.mrb[0].mxu0
      %v1649 = vpop.f32.mrb[0].mxu0
      %v1650 = vpop.f32.mrb[0].mxu0
      %1651 = vdwg.mxu0
      %1652 = vst [vmem:[%s341] sm:$0xff] %v1647
      %p1653 = scmp.lt.s32.totalorder %s20, 1
      %s1654 = scalar_select %p1653, %s20, 1
      %s1655 = smul.addr %s1654, 8
      %s1656 = scalar_lea.vmem %s9, %s1655
      // Predicated region
      $region57: #{forward.1} parent=55 // pred_check
        %p1657 = pneg %p237
      $region58: #{forward.1} parent=55 // pred_check_branch
        %1659 = sbr.rel (%p1657) target = $region60
      $region59: #{forward.1} parent=55 // pred_region
        _
      $region60: #{forward.1} parent=55 // pred_fallthru
        _
    $region56: #{forward.1} parent=5 // pred_fallthru
      _
    %p1660 = scmp.le.s32.totalorder 2, %s15
    // Predicated region
    $region61: #{forward.1} parent=5 // pred_check
      %p1661 = pneg %p1660
    $region62: #{forward.1} parent=5 // pred_check_branch
      %1663 = sbr.rel (%p1661) target = $region64
    $region63: #{forward.1} parent=5 // pred_region
      %s1664 = ssub.s32 %s15, 2
      // Predicated region
      $region65: #{forward.1} parent=63 // pred_check
        %p1665 = pneg %p243
      $region66: #{forward.1} parent=63 // pred_check_branch
        %1667 = sbr.rel (%p1665) target = $region68
      $region67: #{forward.1} parent=63 // pred_region
        %p1668 = scmp.lt.s32.totalorder %s21, 1
        %s1669 = scalar_select %p1668, %s21, 1
        %s1670 = smul.addr %s1669, 8
        %s1671 = scalar_lea.vmem %s9, %s1670
      $region68: #{forward.1} parent=63 // pred_fallthru
        _
    $region64: #{forward.1} parent=5 // pred_fallthru
      _
  $region6: #{forward.1} parent=0 // loop_footer
    %s19 = sadd.s32 1, %s15
  $region7: #{forward.1} parent=0 // loop_footer_branch
    %14 = sbr.rel target = $region3
  $region8: #{forward.1} parent=0 // loop_exit
    _

</llo_original>
